<compile_context>
chip_gen: v6e
topology: v6e:2x2x1
jax: 0.10.0
libtpu: 0.0.40
codegen_flags: <defaults>
</compile_context>

<pallas_src>
import jax
import jax.numpy as jnp
import numpy as np
from jax.experimental import pallas as pl
from jax.experimental.pallas import tpu as pltpu


def _build_kernel(num_conv, kernel_size, padding, seq_len, batch_tile, compute_dtype):
    K, P, L, TB = kernel_size, padding, seq_len, batch_tile

    def kernel(*refs):
        # refs = x, (w0, b0), (w1, b1), ..., wf, bf, out
        x_ref = refs[0]                               # (TB, L, E)
        conv_refs = refs[1:1 + 2 * num_conv]
        wf_ref = refs[1 + 2 * num_conv]               # (L, C_last, O_pad)
        bf_ref = refs[2 + 2 * num_conv]               # (1, O_pad)
        o_ref = refs[3 + 2 * num_conv]                # (TB, O_pad)

        h3 = x_ref[...].astype(jnp.float32)           # (TB, L, C) channels-last

        # --- stack of Conv1d(kernel_size=K, padding=P) + ReLU layers ---
        for i in range(num_conv):
            w_ref = conv_refs[2 * i]                  # (K, C_in, C_out)
            b_ref = conv_refs[2 * i + 1]              # (1, C_out)
            c_in = w_ref.shape[1]
            c_out = w_ref.shape[2]

            # Value-domain zero padding of the time axis (no VMEM scratch).
            if P > 0:
                zpad = jnp.zeros((TB, P, c_in), jnp.float32)
                hp = jnp.concatenate([zpad, h3, zpad], axis=1)   # (TB, L+2P, C_in)
            else:
                hp = h3

            y = None                                  # (TB*L, C_out) tap accumulator
            for k in range(K):
                tap = hp[:, k:k + L, :]               # shifted view: h[:, t+k-P, :]
                contrib = jnp.dot(
                    tap.reshape(TB * L, c_in).astype(compute_dtype),
                    w_ref[k].astype(compute_dtype),
                    preferred_element_type=jnp.float32)
                y = contrib if y is None else y + contrib
            # bias added once after the tap sum, then ReLU
            h3 = jnp.maximum(y + b_ref[...], 0.0).reshape(TB, L, c_out)

        # --- final Conv1d(kernel_size=seq_len): collapse the temporal axis ---
        acc = None                                    # (TB, O_pad)
        for t in range(L):
            contrib = jnp.dot(h3[:, t, :].astype(compute_dtype),
                              wf_ref[t].astype(compute_dtype),
                              preferred_element_type=jnp.float32)
            acc = contrib if acc is None else acc + contrib
        o_ref[...] = (acc + bf_ref[...]).astype(o_ref.dtype)

    return kernel


def _choose_batch_tile(B, L):
    """Batch tile TB: multiple of 8 (or the full B), large enough to fatten the
    MXU M dim (target ~4K rows of TB*L) and amortize the ~0.35us/grid-step
    overhead, capped so >=2 grid blocks remain (>=4 when B >= 32) for megacore
    sharding and double-buffered pipelining; prefers a TB that divides B so the
    wrapper never has to jnp.pad x."""
    if B < 16:
        return B                        # single block; block dim == array dim is legal
    blocks_min = 4 if B >= 32 else 2
    target_rows = 4096
    tb_cap = min((B // blocks_min) // 8 * 8,
                 max(8, (target_rows // max(L, 1)) // 8 * 8))
    tb_cap = max(8, tb_cap)
    for tb in range(tb_cap, 7, -8):     # largest multiple of 8 that divides B
        if B % tb == 0:
            return tb
    return tb_cap                       # ragged tail handled by the pad fallback


def _vmem_limit_bytes(TB, L, E, P, max_c, o_pad, weight_bytes, K):
    f32 = 4
    x_block = TB * L * E * f32
    out_block = TB * o_pad * f32
    # per-layer value intermediates the compiler may keep in VMEM:
    # padded activations, K taps / dot results, accumulator, next-layer h
    interm = (K + 3) * TB * (L + 2 * P) * max(max_c, o_pad) * f32
    need = 2 * x_block + 2 * out_block + 2 * weight_bytes + interm
    # 2x headroom; floor at 32 MiB (>= scoped defaults, below physical on all
    # generations), cap at 64 MiB so it also fits v7x's per-core VMEM.
    return int(min(max(2 * need, 32 * 1024 * 1024), 64 * 1024 * 1024))


def conv1d_flatten_pallas(x, conv_params, final_params, *, kernel_size=3, padding=1,
                          compute_dtype=jnp.float32):
    """x: (B, L, E) float32. conv_params: list of (w[(O,I,K)], b[(O,)]) torch layout.
    final_params: (wf[(O,I,L)], bf[(O,)]). Returns (B, out_features)."""
    B, L, E = x.shape
    K, P = kernel_size, padding
    num_conv = len(conv_params)

    TB = _choose_batch_tile(B, L)
    n_blocks = pl.cdiv(B, TB)
    B_pad = n_blocks * TB
    if B_pad != B:
        # Fallback only — _choose_batch_tile prefers a TB dividing B, so this
        # extra HBM copy of x is normally never materialized.
        x = jnp.pad(x, ((0, B_pad - B), (0, 0), (0, 0)))

    kernel_inputs = [x]
    in_specs = [pl.BlockSpec((TB, L, E), lambda b: (b, 0, 0))]

    max_c = E
    weight_bytes = 0
    for (w, b) in conv_params:
        wk = jnp.transpose(w, (2, 1, 0)).astype(jnp.float32)    # (K, C_in, C_out)
        bk = b.reshape(1, -1).astype(jnp.float32)               # (1, C_out)
        kernel_inputs += [wk, bk]
        in_specs += [pl.BlockSpec(wk.shape, lambda b: (0, 0, 0)),
                     pl.BlockSpec(bk.shape, lambda b: (0, 0))]
        max_c = max(max_c, wk.shape[1], wk.shape[2])
        weight_bytes += (wk.size + bk.size) * 4

    wf, bf = final_params
    out_features = wf.shape[0]
    o_pad = pl.cdiv(out_features, 128) * 128                    # lane-dense output slab
    wfk = jnp.transpose(wf, (2, 1, 0)).astype(jnp.float32)      # (L, C_last, O)
    bfk = bf.reshape(1, -1).astype(jnp.float32)                 # (1, O)
    if o_pad != out_features:
        wfk = jnp.pad(wfk, ((0, 0), (0, 0), (0, o_pad - out_features)))
        bfk = jnp.pad(bfk, ((0, 0), (0, o_pad - out_features)))
    kernel_inputs += [wfk, bfk]
    in_specs += [pl.BlockSpec(wfk.shape, lambda b: (0, 0, 0)),
                 pl.BlockSpec(bfk.shape, lambda b: (0, 0))]
    weight_bytes += (wfk.size + bfk.size) * 4

    kernel = _build_kernel(num_conv, K, P, L, TB, compute_dtype)

    out = pl.pallas_call(
        kernel,
        out_shape=jax.ShapeDtypeStruct((B_pad, o_pad), jnp.float32),
        grid_spec=pltpu.PrefetchScalarGridSpec(
            num_scalar_prefetch=0,
            grid=(n_blocks,),
            in_specs=in_specs,
            out_specs=pl.BlockSpec((TB, o_pad), lambda b: (b, 0)),
        ),
        compiler_params=pltpu.CompilerParams(
            dimension_semantics=("parallel",),
            vmem_limit_bytes=_vmem_limit_bytes(TB, L, E, P, max_c, o_pad,
                                               weight_bytes, K)),
    )(*kernel_inputs)
    return out[:B, :out_features]


def conv1d_flatten_ref(x, conv_params, final_params, *, padding=1):
    """Pure-JAX reference mirroring the PyTorch forward exactly."""
    h = jnp.transpose(x, (0, 2, 1))                             # (B, C, L) == NCW
    dn = ('NCH', 'OIH', 'NCH')
    prec = jax.lax.Precision.HIGHEST
    for (w, b) in conv_params:
        h = jax.lax.conv_general_dilated(h, w, (1,), [(padding, padding)],
                                         dimension_numbers=dn, precision=prec)
        h = jnp.maximum(h + b[None, :, None], 0.0)
    wf, bf = final_params
    h = jax.lax.conv_general_dilated(h, wf, (1,), [(0, 0)],
                                     dimension_numbers=dn, precision=prec)
    h = h + bf[None, :, None]
    return h[:, :, 0]                                           # squeeze(2)


if __name__ == "__main__":
    # Small shapes consistent with the module; B=32 exercises the multi-block
    # (megacore-parallel, pipelined) grid path: TB=8 -> 4 grid blocks.
    B, L, E = 32, 8, 16                 # batch, seq_len, embed_dim
    conv_channels = (32, 16)
    out_features = 16
    K, P = 3, 1

    key = jax.random.PRNGKey(0)
    keys = jax.random.split(key, 2 * (len(conv_channels) + 1) + 1)
    x = jax.random.normal(keys[0], (B, L, E), dtype=jnp.float32)

    # Deterministic parameter init (PyTorch-style uniform bounds; synthetic weights).
    conv_params = []
    c_in = E
    ki = 1
    for c_out in conv_channels:
        bound = 1.0 / float(np.sqrt(c_in * K))
        w = jax.random.uniform(keys[ki], (c_out, c_in, K), jnp.float32, -bound, bound)
        b = jax.random.uniform(keys[ki + 1], (c_out,), jnp.float32, -bound, bound)
        conv_params.append((w, b))
        c_in = c_out
        ki += 2
    bound = 1.0 / float(np.sqrt(c_in * L))
    wf = jax.random.uniform(keys[ki], (out_features, c_in, L), jnp.float32, -bound, bound)
    bf = jax.random.uniform(keys[ki + 1], (out_features,), jnp.float32, -bound, bound)
    final_params = (wf, bf)

    out = conv1d_flatten_pallas(x, conv_params, final_params, kernel_size=K, padding=P)
    out = jax.block_until_ready(out)

    ref = conv1d_flatten_ref(x, conv_params, final_params, padding=P)
    np.testing.assert_allclose(np.asarray(out), np.asarray(ref), rtol=1e-3, atol=1e-3)
    print("KERNEL_OK")
</pallas_src>

<mosaic_0001>
module attributes {stable_mosaic.version = 11 : i64} {
  func.func @kernel(%arg0: i32, %arg1: memref<8x8x16xf32, #tpu.memory_space<vmem>>, %arg2: memref<3x16x32xf32, #tpu.memory_space<vmem>>, %arg3: memref<1x32xf32, #tpu.memory_space<vmem>>, %arg4: memref<3x32x16xf32, #tpu.memory_space<vmem>>, %arg5: memref<1x16xf32, #tpu.memory_space<vmem>>, %arg6: memref<8x16x128xf32, #tpu.memory_space<vmem>>, %arg7: memref<1x128xf32, #tpu.memory_space<vmem>>, %arg8: memref<8x128xf32, #tpu.memory_space<vmem>>) attributes {dimension_semantics = [#tpu.dimension_semantics<parallel>], iteration_bounds = array<i64: 4>, scalar_prefetch = 0 : i64, scratch_operands = 0 : i64, tpu.core_type = #tpu.core_type<tc>, window_params = [{transform_indices = @transform_0, window_bounds = array<i64: 8, 8, 16>}, {pipeline_mode = #tpu.pipeline_mode<synchronous>, transform_indices = @transform_1, window_bounds = array<i64: 3, 16, 32>}, {pipeline_mode = #tpu.pipeline_mode<synchronous>, transform_indices = @transform_2, window_bounds = array<i64: 1, 32>}, {pipeline_mode = #tpu.pipeline_mode<synchronous>, transform_indices = @transform_3, window_bounds = array<i64: 3, 32, 16>}, {pipeline_mode = #tpu.pipeline_mode<synchronous>, transform_indices = @transform_4, window_bounds = array<i64: 1, 16>}, {pipeline_mode = #tpu.pipeline_mode<synchronous>, transform_indices = @transform_5, window_bounds = array<i64: 8, 16, 128>}, {pipeline_mode = #tpu.pipeline_mode<synchronous>, transform_indices = @transform_6, window_bounds = array<i64: 1, 128>}, {transform_indices = @transform_7, window_bounds = array<i64: 8, 128>}]} {
    %c0 = arith.constant 0 : index
    %c0_0 = arith.constant 0 : index
    %c0_1 = arith.constant 0 : index
    %0 = vector.load %arg1[%c0, %c0_0, %c0_1] : memref<8x8x16xf32, #tpu.memory_space<vmem>>, vector<8x8x16xf32>
    %cst = arith.constant 0.000000e+00 : f32
    %1 = vector.broadcast %cst : f32 to vector<8x1x16xf32>
    %2 = tpu.concatenate %1, %0, %1 in 1 : vector<8x1x16xf32>, vector<8x8x16xf32>, vector<8x1x16xf32> -> vector<8x10x16xf32>
    %3 = vector.extract_strided_slice %2 {offsets = [0, 0, 0], sizes = [8, 8, 16], strides = [1, 1, 1]} : vector<8x10x16xf32> to vector<8x8x16xf32>
    %4 = vector.shape_cast %3 : vector<8x8x16xf32> to vector<64x16xf32>
    %c0_2 = arith.constant 0 : index
    %c0_3 = arith.constant 0 : index
    %c0_4 = arith.constant 0 : index
    %5 = vector.load %arg2[%c0_2, %c0_3, %c0_4] : memref<3x16x32xf32, #tpu.memory_space<vmem>>, vector<1x16x32xf32>
    %6 = vector.shape_cast %5 : vector<1x16x32xf32> to vector<16x32xf32>
    %cst_5 = arith.constant dense<0.000000e+00> : vector<64x32xf32>
    %7 = tpu.matmul %4, %6, %cst_5 {dimension_numbers = #tpu.dot_dimension_numbers<[1], [0], [0], [1], [0, 0, 1, 1], [], []>} : vector<64x16xf32>, vector<16x32xf32>, vector<64x32xf32> -> vector<64x32xf32>
    %8 = vector.extract_strided_slice %2 {offsets = [0, 1, 0], sizes = [8, 8, 16], strides = [1, 1, 1]} : vector<8x10x16xf32> to vector<8x8x16xf32>
    %9 = vector.shape_cast %8 : vector<8x8x16xf32> to vector<64x16xf32>
    %c1 = arith.constant 1 : index
    %c0_6 = arith.constant 0 : index
    %c0_7 = arith.constant 0 : index
    %10 = vector.load %arg2[%c1, %c0_6, %c0_7] : memref<3x16x32xf32, #tpu.memory_space<vmem>>, vector<1x16x32xf32>
    %11 = vector.shape_cast %10 : vector<1x16x32xf32> to vector<16x32xf32>
    %cst_8 = arith.constant dense<0.000000e+00> : vector<64x32xf32>
    %12 = tpu.matmul %9, %11, %cst_8 {dimension_numbers = #tpu.dot_dimension_numbers<[1], [0], [0], [1], [0, 0, 1, 1], [], []>} : vector<64x16xf32>, vector<16x32xf32>, vector<64x32xf32> -> vector<64x32xf32>
    %13 = arith.addf %7, %12 : vector<64x32xf32>
    %14 = vector.extract_strided_slice %2 {offsets = [0, 2, 0], sizes = [8, 8, 16], strides = [1, 1, 1]} : vector<8x10x16xf32> to vector<8x8x16xf32>
    %15 = vector.shape_cast %14 : vector<8x8x16xf32> to vector<64x16xf32>
    %c2 = arith.constant 2 : index
    %c0_9 = arith.constant 0 : index
    %c0_10 = arith.constant 0 : index
    %16 = vector.load %arg2[%c2, %c0_9, %c0_10] : memref<3x16x32xf32, #tpu.memory_space<vmem>>, vector<1x16x32xf32>
    %17 = vector.shape_cast %16 : vector<1x16x32xf32> to vector<16x32xf32>
    %cst_11 = arith.constant dense<0.000000e+00> : vector<64x32xf32>
    %18 = tpu.matmul %15, %17, %cst_11 {dimension_numbers = #tpu.dot_dimension_numbers<[1], [0], [0], [1], [0, 0, 1, 1], [], []>} : vector<64x16xf32>, vector<16x32xf32>, vector<64x32xf32> -> vector<64x32xf32>
    %19 = arith.addf %13, %18 : vector<64x32xf32>
    %c0_12 = arith.constant 0 : index
    %c0_13 = arith.constant 0 : index
    %20 = vector.load %arg3[%c0_12, %c0_13] : memref<1x32xf32, #tpu.memory_space<vmem>>, vector<1x32xf32>
    %21 = vector.broadcast %20 : vector<1x32xf32> to vector<64x32xf32>
    %22 = arith.addf %19, %21 : vector<64x32xf32>
    %cst_14 = arith.constant 0.000000e+00 : f32
    %23 = vector.broadcast %cst_14 : f32 to vector<64x32xf32>
    %24 = arith.maximumf %22, %23 : vector<64x32xf32>
    %25 = vector.shape_cast %24 : vector<64x32xf32> to vector<8x8x32xf32>
    %cst_15 = arith.constant 0.000000e+00 : f32
    %26 = vector.broadcast %cst_15 : f32 to vector<8x1x32xf32>
    %27 = tpu.concatenate %26, %25, %26 in 1 : vector<8x1x32xf32>, vector<8x8x32xf32>, vector<8x1x32xf32> -> vector<8x10x32xf32>
    %28 = vector.extract_strided_slice %27 {offsets = [0, 0, 0], sizes = [8, 8, 32], strides = [1, 1, 1]} : vector<8x10x32xf32> to vector<8x8x32xf32>
    %29 = vector.shape_cast %28 : vector<8x8x32xf32> to vector<64x32xf32>
    %c0_16 = arith.constant 0 : index
    %c0_17 = arith.constant 0 : index
    %c0_18 = arith.constant 0 : index
    %30 = vector.load %arg4[%c0_16, %c0_17, %c0_18] : memref<3x32x16xf32, #tpu.memory_space<vmem>>, vector<1x32x16xf32>
    %31 = vector.shape_cast %30 : vector<1x32x16xf32> to vector<32x16xf32>
    %cst_19 = arith.constant dense<0.000000e+00> : vector<64x16xf32>
    %32 = tpu.matmul %29, %31, %cst_19 {dimension_numbers = #tpu.dot_dimension_numbers<[1], [0], [0], [1], [0, 0, 1, 1], [], []>} : vector<64x32xf32>, vector<32x16xf32>, vector<64x16xf32> -> vector<64x16xf32>
    %33 = vector.extract_strided_slice %27 {offsets = [0, 1, 0], sizes = [8, 8, 32], strides = [1, 1, 1]} : vector<8x10x32xf32> to vector<8x8x32xf32>
    %34 = vector.shape_cast %33 : vector<8x8x32xf32> to vector<64x32xf32>
    %c1_20 = arith.constant 1 : index
    %c0_21 = arith.constant 0 : index
    %c0_22 = arith.constant 0 : index
    %35 = vector.load %arg4[%c1_20, %c0_21, %c0_22] : memref<3x32x16xf32, #tpu.memory_space<vmem>>, vector<1x32x16xf32>
    %36 = vector.shape_cast %35 : vector<1x32x16xf32> to vector<32x16xf32>
    %cst_23 = arith.constant dense<0.000000e+00> : vector<64x16xf32>
    %37 = tpu.matmul %34, %36, %cst_23 {dimension_numbers = #tpu.dot_dimension_numbers<[1], [0], [0], [1], [0, 0, 1, 1], [], []>} : vector<64x32xf32>, vector<32x16xf32>, vector<64x16xf32> -> vector<64x16xf32>
    %38 = arith.addf %32, %37 : vector<64x16xf32>
    %39 = vector.extract_strided_slice %27 {offsets = [0, 2, 0], sizes = [8, 8, 32], strides = [1, 1, 1]} : vector<8x10x32xf32> to vector<8x8x32xf32>
    %40 = vector.shape_cast %39 : vector<8x8x32xf32> to vector<64x32xf32>
    %c2_24 = arith.constant 2 : index
    %c0_25 = arith.constant 0 : index
    %c0_26 = arith.constant 0 : index
    %41 = vector.load %arg4[%c2_24, %c0_25, %c0_26] : memref<3x32x16xf32, #tpu.memory_space<vmem>>, vector<1x32x16xf32>
    %42 = vector.shape_cast %41 : vector<1x32x16xf32> to vector<32x16xf32>
    %cst_27 = arith.constant dense<0.000000e+00> : vector<64x16xf32>
    %43 = tpu.matmul %40, %42, %cst_27 {dimension_numbers = #tpu.dot_dimension_numbers<[1], [0], [0], [1], [0, 0, 1, 1], [], []>} : vector<64x32xf32>, vector<32x16xf32>, vector<64x16xf32> -> vector<64x16xf32>
    %44 = arith.addf %38, %43 : vector<64x16xf32>
    %c0_28 = arith.constant 0 : index
    %c0_29 = arith.constant 0 : index
    %45 = vector.load %arg5[%c0_28, %c0_29] : memref<1x16xf32, #tpu.memory_space<vmem>>, vector<1x16xf32>
    %46 = vector.broadcast %45 : vector<1x16xf32> to vector<64x16xf32>
    %47 = arith.addf %44, %46 : vector<64x16xf32>
    %cst_30 = arith.constant 0.000000e+00 : f32
    %48 = vector.broadcast %cst_30 : f32 to vector<64x16xf32>
    %49 = arith.maximumf %47, %48 : vector<64x16xf32>
    %50 = vector.shape_cast %49 : vector<64x16xf32> to vector<8x8x16xf32>
    %51 = vector.extract_strided_slice %50 {offsets = [0, 0, 0], sizes = [8, 1, 16], strides = [1, 1, 1]} : vector<8x8x16xf32> to vector<8x1x16xf32>
    %52 = vector.shape_cast %51 : vector<8x1x16xf32> to vector<8x16xf32>
    %c0_31 = arith.constant 0 : index
    %c0_32 = arith.constant 0 : index
    %c0_33 = arith.constant 0 : index
    %53 = vector.load %arg6[%c0_31, %c0_32, %c0_33] : memref<8x16x128xf32, #tpu.memory_space<vmem>>, vector<1x16x128xf32>
    %54 = vector.shape_cast %53 : vector<1x16x128xf32> to vector<16x128xf32>
    %cst_34 = arith.constant dense<0.000000e+00> : vector<8x128xf32>
    %55 = tpu.matmul %52, %54, %cst_34 {dimension_numbers = #tpu.dot_dimension_numbers<[1], [0], [0], [1], [0, 0, 1, 1], [], []>} : vector<8x16xf32>, vector<16x128xf32>, vector<8x128xf32> -> vector<8x128xf32>
    %56 = vector.extract_strided_slice %50 {offsets = [0, 1, 0], sizes = [8, 1, 16], strides = [1, 1, 1]} : vector<8x8x16xf32> to vector<8x1x16xf32>
    %57 = vector.shape_cast %56 : vector<8x1x16xf32> to vector<8x16xf32>
    %c1_35 = arith.constant 1 : index
    %c0_36 = arith.constant 0 : index
    %c0_37 = arith.constant 0 : index
    %58 = vector.load %arg6[%c1_35, %c0_36, %c0_37] : memref<8x16x128xf32, #tpu.memory_space<vmem>>, vector<1x16x128xf32>
    %59 = vector.shape_cast %58 : vector<1x16x128xf32> to vector<16x128xf32>
    %cst_38 = arith.constant dense<0.000000e+00> : vector<8x128xf32>
    %60 = tpu.matmul %57, %59, %cst_38 {dimension_numbers = #tpu.dot_dimension_numbers<[1], [0], [0], [1], [0, 0, 1, 1], [], []>} : vector<8x16xf32>, vector<16x128xf32>, vector<8x128xf32> -> vector<8x128xf32>
    %61 = arith.addf %55, %60 : vector<8x128xf32>
    %62 = vector.extract_strided_slice %50 {offsets = [0, 2, 0], sizes = [8, 1, 16], strides = [1, 1, 1]} : vector<8x8x16xf32> to vector<8x1x16xf32>
    %63 = vector.shape_cast %62 : vector<8x1x16xf32> to vector<8x16xf32>
    %c2_39 = arith.constant 2 : index
    %c0_40 = arith.constant 0 : index
    %c0_41 = arith.constant 0 : index
    %64 = vector.load %arg6[%c2_39, %c0_40, %c0_41] : memref<8x16x128xf32, #tpu.memory_space<vmem>>, vector<1x16x128xf32>
    %65 = vector.shape_cast %64 : vector<1x16x128xf32> to vector<16x128xf32>
    %cst_42 = arith.constant dense<0.000000e+00> : vector<8x128xf32>
    %66 = tpu.matmul %63, %65, %cst_42 {dimension_numbers = #tpu.dot_dimension_numbers<[1], [0], [0], [1], [0, 0, 1, 1], [], []>} : vector<8x16xf32>, vector<16x128xf32>, vector<8x128xf32> -> vector<8x128xf32>
    %67 = arith.addf %61, %66 : vector<8x128xf32>
    %68 = vector.extract_strided_slice %50 {offsets = [0, 3, 0], sizes = [8, 1, 16], strides = [1, 1, 1]} : vector<8x8x16xf32> to vector<8x1x16xf32>
    %69 = vector.shape_cast %68 : vector<8x1x16xf32> to vector<8x16xf32>
    %c3 = arith.constant 3 : index
    %c0_43 = arith.constant 0 : index
    %c0_44 = arith.constant 0 : index
    %70 = vector.load %arg6[%c3, %c0_43, %c0_44] : memref<8x16x128xf32, #tpu.memory_space<vmem>>, vector<1x16x128xf32>
    %71 = vector.shape_cast %70 : vector<1x16x128xf32> to vector<16x128xf32>
    %cst_45 = arith.constant dense<0.000000e+00> : vector<8x128xf32>
    %72 = tpu.matmul %69, %71, %cst_45 {dimension_numbers = #tpu.dot_dimension_numbers<[1], [0], [0], [1], [0, 0, 1, 1], [], []>} : vector<8x16xf32>, vector<16x128xf32>, vector<8x128xf32> -> vector<8x128xf32>
    %73 = arith.addf %67, %72 : vector<8x128xf32>
    %74 = vector.extract_strided_slice %50 {offsets = [0, 4, 0], sizes = [8, 1, 16], strides = [1, 1, 1]} : vector<8x8x16xf32> to vector<8x1x16xf32>
    %75 = vector.shape_cast %74 : vector<8x1x16xf32> to vector<8x16xf32>
    %c4 = arith.constant 4 : index
    %c0_46 = arith.constant 0 : index
    %c0_47 = arith.constant 0 : index
    %76 = vector.load %arg6[%c4, %c0_46, %c0_47] : memref<8x16x128xf32, #tpu.memory_space<vmem>>, vector<1x16x128xf32>
    %77 = vector.shape_cast %76 : vector<1x16x128xf32> to vector<16x128xf32>
    %cst_48 = arith.constant dense<0.000000e+00> : vector<8x128xf32>
    %78 = tpu.matmul %75, %77, %cst_48 {dimension_numbers = #tpu.dot_dimension_numbers<[1], [0], [0], [1], [0, 0, 1, 1], [], []>} : vector<8x16xf32>, vector<16x128xf32>, vector<8x128xf32> -> vector<8x128xf32>
    %79 = arith.addf %73, %78 : vector<8x128xf32>
    %80 = vector.extract_strided_slice %50 {offsets = [0, 5, 0], sizes = [8, 1, 16], strides = [1, 1, 1]} : vector<8x8x16xf32> to vector<8x1x16xf32>
    %81 = vector.shape_cast %80 : vector<8x1x16xf32> to vector<8x16xf32>
    %c5 = arith.constant 5 : index
    %c0_49 = arith.constant 0 : index
    %c0_50 = arith.constant 0 : index
    %82 = vector.load %arg6[%c5, %c0_49, %c0_50] : memref<8x16x128xf32, #tpu.memory_space<vmem>>, vector<1x16x128xf32>
    %83 = vector.shape_cast %82 : vector<1x16x128xf32> to vector<16x128xf32>
    %cst_51 = arith.constant dense<0.000000e+00> : vector<8x128xf32>
    %84 = tpu.matmul %81, %83, %cst_51 {dimension_numbers = #tpu.dot_dimension_numbers<[1], [0], [0], [1], [0, 0, 1, 1], [], []>} : vector<8x16xf32>, vector<16x128xf32>, vector<8x128xf32> -> vector<8x128xf32>
    %85 = arith.addf %79, %84 : vector<8x128xf32>
    %86 = vector.extract_strided_slice %50 {offsets = [0, 6, 0], sizes = [8, 1, 16], strides = [1, 1, 1]} : vector<8x8x16xf32> to vector<8x1x16xf32>
    %87 = vector.shape_cast %86 : vector<8x1x16xf32> to vector<8x16xf32>
    %c6 = arith.constant 6 : index
    %c0_52 = arith.constant 0 : index
    %c0_53 = arith.constant 0 : index
    %88 = vector.load %arg6[%c6, %c0_52, %c0_53] : memref<8x16x128xf32, #tpu.memory_space<vmem>>, vector<1x16x128xf32>
    %89 = vector.shape_cast %88 : vector<1x16x128xf32> to vector<16x128xf32>
    %cst_54 = arith.constant dense<0.000000e+00> : vector<8x128xf32>
    %90 = tpu.matmul %87, %89, %cst_54 {dimension_numbers = #tpu.dot_dimension_numbers<[1], [0], [0], [1], [0, 0, 1, 1], [], []>} : vector<8x16xf32>, vector<16x128xf32>, vector<8x128xf32> -> vector<8x128xf32>
    %91 = arith.addf %85, %90 : vector<8x128xf32>
    %92 = vector.extract_strided_slice %50 {offsets = [0, 7, 0], sizes = [8, 1, 16], strides = [1, 1, 1]} : vector<8x8x16xf32> to vector<8x1x16xf32>
    %93 = vector.shape_cast %92 : vector<8x1x16xf32> to vector<8x16xf32>
    %c7 = arith.constant 7 : index
    %c0_55 = arith.constant 0 : index
    %c0_56 = arith.constant 0 : index
    %94 = vector.load %arg6[%c7, %c0_55, %c0_56] : memref<8x16x128xf32, #tpu.memory_space<vmem>>, vector<1x16x128xf32>
    %95 = vector.shape_cast %94 : vector<1x16x128xf32> to vector<16x128xf32>
    %cst_57 = arith.constant dense<0.000000e+00> : vector<8x128xf32>
    %96 = tpu.matmul %93, %95, %cst_57 {dimension_numbers = #tpu.dot_dimension_numbers<[1], [0], [0], [1], [0, 0, 1, 1], [], []>} : vector<8x16xf32>, vector<16x128xf32>, vector<8x128xf32> -> vector<8x128xf32>
    %97 = arith.addf %91, %96 : vector<8x128xf32>
    %c0_58 = arith.constant 0 : index
    %c0_59 = arith.constant 0 : index
    %98 = vector.load %arg7[%c0_58, %c0_59] : memref<1x128xf32, #tpu.memory_space<vmem>>, vector<1x128xf32>
    %99 = vector.broadcast %98 : vector<1x128xf32> to vector<8x128xf32>
    %100 = arith.addf %97, %99 : vector<8x128xf32>
    %c0_60 = arith.constant 0 : index
    %c0_61 = arith.constant 0 : index
    %101 = vector.load %arg8[%c0_60, %c0_61] : memref<8x128xf32, #tpu.memory_space<vmem>>, vector<8x128xf32>
    tpu.vector_store %arg8[%c0_60, %c0_61], %100 {strides = array<i32>} : memref<8x128xf32, #tpu.memory_space<vmem>>, vector<8x128xf32>,
    return
  }
  func.func @transform_0(%arg0: i32) -> (i32, i32, i32) {
    %c0_i32 = arith.constant 0 : i32
    %c0_i32_0 = arith.constant 0 : i32
    %c0_i32_1 = arith.constant 0 : i32
    return %arg0, %c0_i32, %c0_i32_0 : i32, i32, i32
  }
  func.func @transform_1(%arg0: i32) -> (i32, i32, i32) {
    %c0_i32 = arith.constant 0 : i32
    %c0_i32_0 = arith.constant 0 : i32
    %c0_i32_1 = arith.constant 0 : i32
    %c0_i32_2 = arith.constant 0 : i32
    return %c0_i32, %c0_i32_0, %c0_i32_1 : i32, i32, i32
  }
  func.func @transform_2(%arg0: i32) -> (i32, i32) {
    %c0_i32 = arith.constant 0 : i32
    %c0_i32_0 = arith.constant 0 : i32
    %c0_i32_1 = arith.constant 0 : i32
    return %c0_i32, %c0_i32_0 : i32, i32
  }
  func.func @transform_3(%arg0: i32) -> (i32, i32, i32) {
    %c0_i32 = arith.constant 0 : i32
    %c0_i32_0 = arith.constant 0 : i32
    %c0_i32_1 = arith.constant 0 : i32
    %c0_i32_2 = arith.constant 0 : i32
    return %c0_i32, %c0_i32_0, %c0_i32_1 : i32, i32, i32
  }
  func.func @transform_4(%arg0: i32) -> (i32, i32) {
    %c0_i32 = arith.constant 0 : i32
    %c0_i32_0 = arith.constant 0 : i32
    %c0_i32_1 = arith.constant 0 : i32
    return %c0_i32, %c0_i32_0 : i32, i32
  }
  func.func @transform_5(%arg0: i32) -> (i32, i32, i32) {
    %c0_i32 = arith.constant 0 : i32
    %c0_i32_0 = arith.constant 0 : i32
    %c0_i32_1 = arith.constant 0 : i32
    %c0_i32_2 = arith.constant 0 : i32
    return %c0_i32, %c0_i32_0, %c0_i32_1 : i32, i32, i32
  }
  func.func @transform_6(%arg0: i32) -> (i32, i32) {
    %c0_i32 = arith.constant 0 : i32
    %c0_i32_0 = arith.constant 0 : i32
    %c0_i32_1 = arith.constant 0 : i32
    return %c0_i32, %c0_i32_0 : i32, i32
  }
  func.func @transform_7(%arg0: i32) -> (i32, i32) {
    %c0_i32 = arith.constant 0 : i32
    %c0_i32_0 = arith.constant 0 : i32
    return %arg0, %c0_i32 : i32, i32
  }
}

</mosaic_0001>

<llo_original>
// kernel: tpu_custom_call.1
$region0: #{tpu_custom_call.1}
  #allocation0 [shape = 'u32[]', space=smem, size = 0x4, offset = 0x4, fixed_abs, tag = 'smem constant byte address 0x4 - core index']
  #allocation1 [shape = 'u32[144,128]{1,0:T(1,128)}', space=vmem, size = 0x12000, scoped, tag = 'internal scratch']
  %s0 = inlined_call_operand.vmem [shape: f32[32,8,16], index: 0, kind: input, shape index: {}]
  %s1 = inlined_call_operand.vmem [shape: f32[3,16,32], index: 1, kind: input, shape index: {}]
  %s2 = inlined_call_operand.vmem [shape: f32[1,32], index: 2, kind: input, shape index: {}]
  %s3 = inlined_call_operand.vmem [shape: f32[3,32,16], index: 3, kind: input, shape index: {}]
  %s4 = inlined_call_operand.vmem [shape: f32[1,16], index: 4, kind: input, shape index: {}]
  %s5 = inlined_call_operand.vmem [shape: f32[8,16,128], index: 5, kind: input, shape index: {}]
  %s6 = inlined_call_operand.vmem [shape: f32[1,128], index: 6, kind: input, shape index: {}]
  %s7 = inlined_call_operand.hbm [shape: f32[32,128], index: 7, kind: output, shape index: {}]
  %s8 = sld [smem:[#allocation0]]
  $region61: #{tpu_custom_call.1} parent=0
    _
  %s10 = ssub.s32 1, %s8
  %s11 = scalar_select 0, %s10, %s8
  $region1: #{tpu_custom_call.1} parent=0
    #allocation2 [shape = 'u8[8192]{0}', space=vmem, size = 0x2000, scoped, tag = 'output window, operand 0']
    #allocation3 [shape = 's32[2]{0}', space=sflag, size = 0x8, scoped, tag = 'scoped memory for tpu_custom_call.1']
    %12 = vsyncpa [#allocation3], 0
    %s13 = scalar_lea.sflag [#allocation3], 1
    %14 = vsyncpa %s13, 0
    loop: start=0, step=1, limit=6
    $region2: #{tpu_custom_call.1} parent=1 // loop_pre_header
      _
    $region3: #{tpu_custom_call.1} parent=1 // loop_header
      %s16 = sphi 0, %s20
      %p17 = scmp.ge.s32.totalorder %s16, 6
      %s26 = sphi 0, %s28
      %s29 = sphi 0, %s26
      %s30 = sphi 0, %s29
      %s46 = sphi 0, %s30
      %s50 = sphi 0, %s50
      %s52 = sphi 0, %s50
      %s53 = sphi 0, %s52
      %s67 = sphi 0, %s53
      %s71 = sphi 0, %s71
      %s73 = sphi 0, %s71
      %s74 = sphi 0, %s73
      %s88 = sphi 0, %s74
      %s92 = sphi 0, %s92
      %s94 = sphi 0, %s92
      %s95 = sphi 0, %s94
      %s109 = sphi 0, %s95
      %s113 = sphi 0, %s113
      %s115 = sphi 0, %s113
      %s116 = sphi 0, %s115
      %s130 = sphi 0, %s116
      %s134 = sphi 0, %s134
      %s136 = sphi 0, %s134
      %s137 = sphi 0, %s136
      %s151 = sphi 0, %s137
      %s155 = sphi 0, %s155
      %s157 = sphi 0, %s155
      %s158 = sphi 0, %s157
      %s172 = sphi 0, %s158
      %s178 = sphi 0, %s180
      %s181 = sphi 0, %s178
      %s182 = sphi 0, %s181
      %s198 = sphi 0, %s182
    $region4: #{tpu_custom_call.1} parent=1 // loop_header_branch
      %19 = sbr.rel (%p17) target = $region8
    $region5: #{tpu_custom_call.1} parent=1 // loop_body
      %s21 = ssub.s32 %s16, 1
      %s22 = ssub.s32 %s16, 2
      %s23 = sadd.s32 %s16, 1
      %s24 = ssub.s32 %s16, %s23
      %p25 = scmp.eq.s32.totalorder %s24, 0
      %s27 = sadd.s32 %s26, 1
      %s28 = scalar_select %p25, %s26, %s27
      %p31 = pneg %p25
      %p32 = scmp.eq.s32.totalorder %s16, 3
      %p33 = por %p31, %p32
      %p34 = scmp.ne.s32.totalorder %s26, %s29
      %p35 = scmp.eq.s32.totalorder %s16, 0
      %p36 = por %p34, %p35
      %p37 = scmp.ne.s32.totalorder %s26, %s29
      %p38 = scmp.eq.s32.totalorder %s21, 3
      %p39 = por %p37, %p38
      %p40 = scmp.ne.s32.totalorder %s29, %s30
      %p41 = scmp.eq.s32.totalorder %s21, 0
      %p42 = por %p40, %p41
      %p43 = scmp.ne.s32.totalorder %s29, %s30
      %p44 = scmp.eq.s32.totalorder %s22, 3
      %p45 = por %p43, %p44
      %p47 = scmp.ne.s32.totalorder %s30, %s46
      %p48 = scmp.eq.s32.totalorder %s22, 0
      %p49 = por %p47, %p48
      %s51 = sadd.s32 %s50, 1
      %p54 = scmp.eq.s32.totalorder %s16, 3
      %p55 = scmp.ne.s32.totalorder %s50, %s52
      %p56 = scmp.eq.s32.totalorder %s16, 0
      %p57 = por %p55, %p56
      %p58 = scmp.ne.s32.totalorder %s50, %s52
      %p59 = scmp.eq.s32.totalorder %s21, 3
      %p60 = por %p58, %p59
      %p61 = scmp.ne.s32.totalorder %s52, %s53
      %p62 = scmp.eq.s32.totalorder %s21, 0
      %p63 = por %p61, %p62
      %p64 = scmp.ne.s32.totalorder %s52, %s53
      %p65 = scmp.eq.s32.totalorder %s22, 3
      %p66 = por %p64, %p65
      %p68 = scmp.ne.s32.totalorder %s53, %s67
      %p69 = scmp.eq.s32.totalorder %s22, 0
      %p70 = por %p68, %p69
      %s72 = sadd.s32 %s71, 1
      %p75 = scmp.eq.s32.totalorder %s16, 3
      %p76 = scmp.ne.s32.totalorder %s71, %s73
      %p77 = scmp.eq.s32.totalorder %s16, 0
      %p78 = por %p76, %p77
      %p79 = scmp.ne.s32.totalorder %s71, %s73
      %p80 = scmp.eq.s32.totalorder %s21, 3
      %p81 = por %p79, %p80
      %p82 = scmp.ne.s32.totalorder %s73, %s74
      %p83 = scmp.eq.s32.totalorder %s21, 0
      %p84 = por %p82, %p83
      %p85 = scmp.ne.s32.totalorder %s73, %s74
      %p86 = scmp.eq.s32.totalorder %s22, 3
      %p87 = por %p85, %p86
      %p89 = scmp.ne.s32.totalorder %s74, %s88
      %p90 = scmp.eq.s32.totalorder %s22, 0
      %p91 = por %p89, %p90
      %s93 = sadd.s32 %s92, 1
      %p96 = scmp.eq.s32.totalorder %s16, 3
      %p97 = scmp.ne.s32.totalorder %s92, %s94
      %p98 = scmp.eq.s32.totalorder %s16, 0
      %p99 = por %p97, %p98
      %p100 = scmp.ne.s32.totalorder %s92, %s94
      %p101 = scmp.eq.s32.totalorder %s21, 3
      %p102 = por %p100, %p101
      %p103 = scmp.ne.s32.totalorder %s94, %s95
      %p104 = scmp.eq.s32.totalorder %s21, 0
      %p105 = por %p103, %p104
      %p106 = scmp.ne.s32.totalorder %s94, %s95
      %p107 = scmp.eq.s32.totalorder %s22, 3
      %p108 = por %p106, %p107
      %p110 = scmp.ne.s32.totalorder %s95, %s109
      %p111 = scmp.eq.s32.totalorder %s22, 0
      %p112 = por %p110, %p111
      %s114 = sadd.s32 %s113, 1
      %p117 = scmp.eq.s32.totalorder %s16, 3
      %p118 = scmp.ne.s32.totalorder %s113, %s115
      %p119 = scmp.eq.s32.totalorder %s16, 0
      %p120 = por %p118, %p119
      %p121 = scmp.ne.s32.totalorder %s113, %s115
      %p122 = scmp.eq.s32.totalorder %s21, 3
      %p123 = por %p121, %p122
      %p124 = scmp.ne.s32.totalorder %s115, %s116
      %p125 = scmp.eq.s32.totalorder %s21, 0
      %p126 = por %p124, %p125
      %p127 = scmp.ne.s32.totalorder %s115, %s116
      %p128 = scmp.eq.s32.totalorder %s22, 3
      %p129 = por %p127, %p128
      %p131 = scmp.ne.s32.totalorder %s116, %s130
      %p132 = scmp.eq.s32.totalorder %s22, 0
      %p133 = por %p131, %p132
      %s135 = sadd.s32 %s134, 1
      %p138 = scmp.eq.s32.totalorder %s16, 3
      %p139 = scmp.ne.s32.totalorder %s134, %s136
      %p140 = scmp.eq.s32.totalorder %s16, 0
      %p141 = por %p139, %p140
      %p142 = scmp.ne.s32.totalorder %s134, %s136
      %p143 = scmp.eq.s32.totalorder %s21, 3
      %p144 = por %p142, %p143
      %p145 = scmp.ne.s32.totalorder %s136, %s137
      %p146 = scmp.eq.s32.totalorder %s21, 0
      %p147 = por %p145, %p146
      %p148 = scmp.ne.s32.totalorder %s136, %s137
      %p149 = scmp.eq.s32.totalorder %s22, 3
      %p150 = por %p148, %p149
      %p152 = scmp.ne.s32.totalorder %s137, %s151
      %p153 = scmp.eq.s32.totalorder %s22, 0
      %p154 = por %p152, %p153
      %s156 = sadd.s32 %s155, 1
      %p159 = scmp.eq.s32.totalorder %s16, 3
      %p160 = scmp.ne.s32.totalorder %s155, %s157
      %p161 = scmp.eq.s32.totalorder %s16, 0
      %p162 = por %p160, %p161
      %p163 = scmp.ne.s32.totalorder %s155, %s157
      %p164 = scmp.eq.s32.totalorder %s21, 3
      %p165 = por %p163, %p164
      %p166 = scmp.ne.s32.totalorder %s157, %s158
      %p167 = scmp.eq.s32.totalorder %s21, 0
      %p168 = por %p166, %p167
      %p169 = scmp.ne.s32.totalorder %s157, %s158
      %p170 = scmp.eq.s32.totalorder %s22, 3
      %p171 = por %p169, %p170
      %p173 = scmp.ne.s32.totalorder %s158, %s172
      %p174 = scmp.eq.s32.totalorder %s22, 0
      %p175 = por %p173, %p174
      %s176 = ssub.s32 %s16, %s23
      %p177 = scmp.eq.s32.totalorder %s176, 0
      %s179 = sadd.s32 %s178, 1
      %s180 = scalar_select %p177, %s178, %s179
      %p183 = pneg %p177
      %p184 = scmp.eq.s32.totalorder %s16, 3
      %p185 = por %p183, %p184
      %p186 = scmp.ne.s32.totalorder %s178, %s181
      %p187 = scmp.eq.s32.totalorder %s16, 0
      %p188 = por %p186, %p187
      %p189 = scmp.ne.s32.totalorder %s178, %s181
      %p190 = scmp.eq.s32.totalorder %s21, 3
      %p191 = por %p189, %p190
      %p192 = scmp.ne.s32.totalorder %s181, %s182
      %p193 = scmp.eq.s32.totalorder %s21, 0
      %p194 = por %p192, %p193
      %p195 = scmp.ne.s32.totalorder %s181, %s182
      %p196 = scmp.eq.s32.totalorder %s22, 3
      %p197 = por %p195, %p196
      %p199 = scmp.ne.s32.totalorder %s182, %s198
      %p200 = scmp.eq.s32.totalorder %s22, 0
      %p201 = por %p199, %p200
      %p202 = scmp.le.s32.totalorder 1, %s16
      %p203 = scmp.lt.s32.totalorder %s16, 5
      %p204 = pnand %p202, %p203
      %p205 = pneg %p204
      // Predicated region
      $region9: #{tpu_custom_call.1} parent=5 // pred_check
        _
      $region10: #{tpu_custom_call.1} parent=5 // pred_check_branch
        %207 = sbr.rel (%p204) target = $region12
      $region11: #{tpu_custom_call.1} parent=5 // pred_region
        %s208 = ssub.s32 %s16, 1
        // Predicated region
        $region13: #{tpu_custom_call.1} parent=11 // pred_check
          %p209 = pneg %p63
        $region14: #{tpu_custom_call.1} parent=11 // pred_check_branch
          %211 = sbr.rel (%p209) target = $region16
        $region15: #{tpu_custom_call.1} parent=11 // pred_region
          _
        $region16: #{tpu_custom_call.1} parent=11 // pred_fallthru
          _
        // Predicated region
        $region17: #{tpu_custom_call.1} parent=11 // pred_check
          %p212 = pneg %p84
        $region18: #{tpu_custom_call.1} parent=11 // pred_check_branch
          %214 = sbr.rel (%p212) target = $region20
        $region19: #{tpu_custom_call.1} parent=11 // pred_region
          _
        $region20: #{tpu_custom_call.1} parent=11 // pred_fallthru
          _
        // Predicated region
        $region21: #{tpu_custom_call.1} parent=11 // pred_check
          %p215 = pneg %p105
        $region22: #{tpu_custom_call.1} parent=11 // pred_check_branch
          %217 = sbr.rel (%p215) target = $region24
        $region23: #{tpu_custom_call.1} parent=11 // pred_region
          _
        $region24: #{tpu_custom_call.1} parent=11 // pred_fallthru
          _
        // Predicated region
        $region25: #{tpu_custom_call.1} parent=11 // pred_check
          %p218 = pneg %p126
        $region26: #{tpu_custom_call.1} parent=11 // pred_check_branch
          %220 = sbr.rel (%p218) target = $region28
        $region27: #{tpu_custom_call.1} parent=11 // pred_region
          _
        $region28: #{tpu_custom_call.1} parent=11 // pred_fallthru
          _
        // Predicated region
        $region29: #{tpu_custom_call.1} parent=11 // pred_check
          %p221 = pneg %p147
        $region30: #{tpu_custom_call.1} parent=11 // pred_check_branch
          %223 = sbr.rel (%p221) target = $region32
        $region31: #{tpu_custom_call.1} parent=11 // pred_region
          _
        $region32: #{tpu_custom_call.1} parent=11 // pred_fallthru
          _
        // Predicated region
        $region33: #{tpu_custom_call.1} parent=11 // pred_check
          %p224 = pneg %p168
        $region34: #{tpu_custom_call.1} parent=11 // pred_check_branch
          %226 = sbr.rel (%p224) target = $region36
        $region35: #{tpu_custom_call.1} parent=11 // pred_region
          _
        $region36: #{tpu_custom_call.1} parent=11 // pred_fallthru
          _
      $region12: #{tpu_custom_call.1} parent=5 // pred_fallthru
        _
      %p227 = scmp.lt.s32.totalorder %s16, 4
      // Predicated region
      $region37: #{tpu_custom_call.1} parent=5 // pred_check
        %p228 = pneg %p227
      $region38: #{tpu_custom_call.1} parent=5 // pred_check_branch
        %230 = sbr.rel (%p228) target = $region40
      $region39: #{tpu_custom_call.1} parent=5 // pred_region
        // Predicated region
        $region41: #{tpu_custom_call.1} parent=39 // pred_check
          %p231 = pneg %p36
        $region42: #{tpu_custom_call.1} parent=39 // pred_check_branch
          %233 = sbr.rel (%p231) target = $region44
        $region43: #{tpu_custom_call.1} parent=39 // pred_region
          %s234 = smul.u32 8, %s16
          %p235 = scmp.lt.s32.totalorder %s234, 31
          %s236 = scalar_select %p235, %s234, 31
          %s237 = smul.addr %s236, 8
          %s238 = scalar_lea.vmem %s0, %s237
          %s239 = smul.u32 8, %s16
        $region44: #{tpu_custom_call.1} parent=39 // pred_fallthru
          _
      $region40: #{tpu_custom_call.1} parent=5 // pred_fallthru
        _
      %p240 = scmp.le.s32.totalorder 1, %s16
      %p241 = scmp.lt.s32.totalorder %s16, 5
      %p242 = pnand %p240, %p241
      %p243 = pneg %p242
      // Predicated region
      $region45: #{tpu_custom_call.1} parent=5 // pred_check
        _
      $region46: #{tpu_custom_call.1} parent=5 // pred_check_branch
        %245 = sbr.rel (%p242) target = $region48
      $region47: #{tpu_custom_call.1} parent=5 // pred_region
        %s246 = ssub.s32 %s16, 1
        %s247 = smul.u32 8, %s21
        %p248 = scmp.lt.s32.totalorder %s247, 31
        %s249 = scalar_select %p248, %s247, 31
        %s250 = smul.addr %s249, 8
        %s251 = scalar_lea.vmem %s0, %s250
        %p252 = pneg %p42
        %p253 = pneg %p39
        %p254 = pneg %p63
        %p255 = pneg %p60
        %p256 = pneg %p84
        %p257 = pneg %p81
        %p258 = pneg %p105
        %p259 = pneg %p102
        %p260 = pneg %p126
        %p261 = pneg %p123
        %p262 = pneg %p147
        %p263 = pneg %p144
        %p264 = pneg %p168
        %p265 = pneg %p165
        %p266 = pneg %p194
        %p267 = pneg %p191
        %s268 = sand.u32 %s181, 1
        %s269 = scalar_lea.sflag [#allocation3], %s268
        %s270 = sand.u32 %s181, 1
        %s271 = smul.addr %s270, 8
        %s272 = scalar_lea.vmem [#allocation2], %s271
        %s273 = smul.u32 8, %s21
        %p274 = scmp.lt.s32.totalorder %s273, 31
        %s275 = scalar_select %p274, %s273, 31
        %s276 = smul.addr %s275, 8
        %s277 = scalar_lea.vmem %s0, %s276
        %s278 = smul.u32 8, %s21
        %v279 = vld [vmem:[%s277] sm:$0xff]
        %v280 = vld [vmem:[%s277 + $0x8] sm:$0xff]
        %v281 = vld [vmem:[%s277 + $0x10] sm:$0xff]
        %v282 = vld [vmem:[%s277 + $0x18] sm:$0xff]
        %v283 = vld [vmem:[%s277 + $0x20] sm:$0xff]
        %v284 = vld [vmem:[%s277 + $0x28] sm:$0xff]
        %v285 = vld [vmem:[%s277 + $0x30] sm:$0xff]
        %v286 = vld [vmem:[%s277 + $0x38] sm:$0xff]
        %v295 = vrot.slane %v279, 7
        %v296 = vrot.slane %v280, 7
        %v297 = vrot.slane %v281, 7
        %v298 = vrot.slane %v282, 7
        %v299 = vrot.slane %v283, 7
        %v300 = vrot.slane %v284, 7
        %v301 = vrot.slane %v285, 7
        %v302 = vrot.slane %v286, 7
        %vm311 = vcmask 1040384
        %v312 = vsel %vm311, 0.0, %v295
        %v313 = vsel %vm311, 0.0, %v296
        %v314 = vsel %vm311, 0.0, %v297
        %v315 = vsel %vm311, 0.0, %v298
        %v316 = vsel %vm311, 0.0, %v299
        %v317 = vsel %vm311, 0.0, %v300
        %v318 = vsel %vm311, 0.0, %v301
        %v319 = vsel %vm311, 0.0, %v302
        %v320 = vsel %vm311, %v295, 0.0
        %v321 = vsel %vm311, %v296, 0.0
        %v322 = vsel %vm311, %v297, 0.0
        %v323 = vsel %vm311, %v298, 0.0
        %v324 = vsel %vm311, %v299, 0.0
        %v325 = vsel %vm311, %v300, 0.0
        %v326 = vsel %vm311, %v301, 0.0
        %v327 = vsel %vm311, %v302, 0.0
        %v328 = vld [vmem:[%s1] sm:$0xff]
        %v329 = vld [vmem:[%s1 + $0x8] sm:$0xff]
        %vm346 = vcmask 1046528
        %v347 = vrot.slane %v312, 1
        %v348 = vrot.slane %v320, 1
        %v349 = vsel %vm346, %v347, %v348
        %v350 = vrot.slane %v313, 1
        %v351 = vrot.slane %v321, 1
        %v352 = vsel %vm346, %v350, %v351
        %v353 = vrot.slane %v314, 1
        %v354 = vrot.slane %v322, 1
        %v355 = vsel %vm346, %v353, %v354
        %v356 = vrot.slane %v315, 1
        %v357 = vrot.slane %v323, 1
        %v358 = vsel %vm346, %v356, %v357
        %v359 = vrot.slane %v316, 1
        %v360 = vrot.slane %v324, 1
        %v361 = vsel %vm346, %v359, %v360
        %v362 = vrot.slane %v317, 1
        %v363 = vrot.slane %v325, 1
        %v364 = vsel %vm346, %v362, %v363
        %v365 = vrot.slane %v318, 1
        %v366 = vrot.slane %v326, 1
        %v367 = vsel %vm346, %v365, %v366
        %v368 = vrot.slane %v319, 1
        %v369 = vrot.slane %v327, 1
        %v370 = vsel %vm346, %v368, %v369
        %s371 = scalar_lea.vmem %s1, 16
        %v372 = vld [vmem:[%s371] sm:$0xff]
        %v373 = vld [vmem:[%s371 + $0x8] sm:$0xff]
        %vm374 = vcmask 130048
        %v375 = vsel %vm374, %v349, 0
        %v377 = vsel %vm374, %v352, 0
        %v379 = vsel %vm374, %v355, 0
        %v381 = vsel %vm374, %v358, 0
        %v383 = vsel %vm374, %v361, 0
        %v385 = vsel %vm374, %v364, 0
        %v387 = vsel %vm374, %v367, 0
        %v389 = vsel %vm374, %v370, 0
        %391 = vmatprep.subr.mxu0 0.0
        %392 = vmatpush1.msra.mxu0 0.0
        %393 = vmatprep.subr.mxu0 0.0
        %394 = vmatpush1.msra.mxu0 0.0
        %395 = vmatprep.subr.mxu0 0.0
        %396 = vmatpush1.msra.mxu0 0.0
        %397 = vmatprep.subr.mxu0 0.0
        %398 = vmatpush1.msra.mxu0 0.0
        %399 = vmatprep.subr.mxu0 0.0
        %400 = vmatpush1.msra.mxu0 0.0
        %401 = vmatprep.subr.mxu0 0.0
        %402 = vmatpush1.msra.mxu0 0.0
        %403 = vmatprep.subr.mxu0 0.0
        %404 = vmatpush1.msra.mxu0 0.0
        %405 = vmatprep.subr.mxu0 0.0
        %406 = vmatpush1.msra.mxu0 0.0
        %407 = vmatprep.subr.mxu0 0.0
        %408 = vmatpush1.msra.mxu0 0.0
        %409 = vmatprep.subr.mxu0 0.0
        %410 = vmatpush1.msra.mxu0 0.0
        %411 = vmatprep.subr.mxu0 0.0
        %412 = vmatpush1.msra.mxu0 0.0
        %413 = vmatprep.subr.mxu0 0.0
        %414 = vmatpush1.msra.mxu0 0.0
        %415 = vmatprep.subr.mxu0 0.0
        %416 = vmatpush1.msra.mxu0 0.0
        %417 = vmatprep.subr.mxu0 0.0
        %418 = vmatpush1.msra.mxu0 0.0
        %419 = vmatprep.subr.mxu0 0.0
        %420 = vmatpush1.msra.mxu0 %v373
        %421 = vmatprep.subr.mxu0 0.0
        %422 = vmatpush1.msra.mxu0 %v372
        %423 = vmatprep.subr.mxu0 0.0
        %424 = vmatpush2.msra.mxu0 0.0
        %425 = vmatprep.subr.mxu0 0.0
        %426 = vmatpush2.msra.mxu0 0.0
        %427 = vmatprep.subr.mxu0 0.0
        %428 = vmatpush2.msra.mxu0 0.0
        %429 = vmatprep.subr.mxu0 0.0
        %430 = vmatpush2.msra.mxu0 0.0
        %431 = vmatprep.subr.mxu0 0.0
        %432 = vmatpush2.msra.mxu0 0.0
        %433 = vmatprep.subr.mxu0 0.0
        %434 = vmatpush2.msra.mxu0 0.0
        %435 = vmatprep.subr.mxu0 0.0
        %436 = vmatpush2.msra.mxu0 0.0
        %437 = vmatprep.subr.mxu0 0.0
        %438 = vmatpush2.msra.mxu0 0.0
        %439 = vmatprep.subr.mxu0 0.0
        %440 = vmatpush2.msra.mxu0 0.0
        %441 = vmatprep.subr.mxu0 0.0
        %442 = vmatpush2.msra.mxu0 0.0
        %443 = vmatprep.subr.mxu0 0.0
        %444 = vmatpush2.msra.mxu0 0.0
        %445 = vmatprep.subr.mxu0 0.0
        %446 = vmatpush2.msra.mxu0 0.0
        %447 = vmatprep.subr.mxu0 0.0
        %448 = vmatpush2.msra.mxu0 0.0
        %449 = vmatprep.subr.mxu0 0.0
        %450 = vmatpush2.msra.mxu0 0.0
        %451 = vmatprep.subr.mxu0 0.0
        %452 = vmatpush2.msra.mxu0 0.0
        %453 = vmatprep.subr.mxu0 0.0
        %454 = vmatpush2.msra.mxu0 0.0
        %455 = vmatprep.mubr.f32.mxu0 0.0
        %456 = vmatmul.mubr.f32.gmra.mxu0 %v375
        %v457 = vpop.f32.mrf.mxu0
        %v458 = vadd.f32 0.0, %v457
        %v459 = vpop.f32.mrf.mxu0
        %460 = vmatprep.mubr.f32.mxu0 0.0
        %461 = vmatmul.mubr.f32.gmra.mxu0 %v377
        %v462 = vpop.f32.mrf.mxu0
        %v463 = vadd.f32 0.0, %v462
        %v464 = vpop.f32.mrf.mxu0
        %465 = vmatprep.mubr.f32.mxu0 0.0
        %466 = vmatmul.mubr.f32.gmra.mxu0 %v379
        %v467 = vpop.f32.mrf.mxu0
        %v468 = vadd.f32 0.0, %v467
        %v469 = vpop.f32.mrf.mxu0
        %470 = vmatprep.mubr.f32.mxu0 0.0
        %471 = vmatmul.mubr.f32.gmra.mxu0 %v381
        %v472 = vpop.f32.mrf.mxu0
        %v473 = vadd.f32 0.0, %v472
        %v474 = vpop.f32.mrf.mxu0
        %475 = vmatprep.mubr.f32.mxu0 0.0
        %476 = vmatmul.mubr.f32.gmra.mxu0 %v383
        %v477 = vpop.f32.mrf.mxu0
        %v478 = vadd.f32 0.0, %v477
        %v479 = vpop.f32.mrf.mxu0
        %480 = vmatprep.mubr.f32.mxu0 0.0
        %481 = vmatmul.mubr.f32.gmra.mxu0 %v385
        %v482 = vpop.f32.mrf.mxu0
        %v483 = vadd.f32 0.0, %v482
        %v484 = vpop.f32.mrf.mxu0
        %485 = vmatprep.mubr.f32.mxu0 0.0
        %486 = vmatmul.mubr.f32.gmra.mxu0 %v387
        %v487 = vpop.f32.mrf.mxu0
        %v488 = vadd.f32 0.0, %v487
        %v489 = vpop.f32.mrf.mxu0
        %490 = vmatprep.mubr.f32.mxu0 0.0
        %491 = vmatmul.mubr.f32.gmra.mxu0 %v389
        %v492 = vpop.f32.mrf.mxu0
        %v493 = vadd.f32 0.0, %v492
        %v494 = vpop.f32.mrf.mxu0
        %495 = vdwg.mxu0
        %v496 = vsel %vm374, %v312, 0
        %v498 = vsel %vm374, %v313, 0
        %v500 = vsel %vm374, %v314, 0
        %v502 = vsel %vm374, %v315, 0
        %v504 = vsel %vm374, %v316, 0
        %v506 = vsel %vm374, %v317, 0
        %v508 = vsel %vm374, %v318, 0
        %v510 = vsel %vm374, %v319, 0
        %512 = vmatprep.subr.mxu0 0.0
        %513 = vmatpush1.msra.mxu0 0.0
        %514 = vmatprep.subr.mxu0 0.0
        %515 = vmatpush1.msra.mxu0 0.0
        %516 = vmatprep.subr.mxu0 0.0
        %517 = vmatpush1.msra.mxu0 0.0
        %518 = vmatprep.subr.mxu0 0.0
        %519 = vmatpush1.msra.mxu0 0.0
        %520 = vmatprep.subr.mxu0 0.0
        %521 = vmatpush1.msra.mxu0 0.0
        %522 = vmatprep.subr.mxu0 0.0
        %523 = vmatpush1.msra.mxu0 0.0
        %524 = vmatprep.subr.mxu0 0.0
        %525 = vmatpush1.msra.mxu0 0.0
        %526 = vmatprep.subr.mxu0 0.0
        %527 = vmatpush1.msra.mxu0 0.0
        %528 = vmatprep.subr.mxu0 0.0
        %529 = vmatpush1.msra.mxu0 0.0
        %530 = vmatprep.subr.mxu0 0.0
        %531 = vmatpush1.msra.mxu0 0.0
        %532 = vmatprep.subr.mxu0 0.0
        %533 = vmatpush1.msra.mxu0 0.0
        %534 = vmatprep.subr.mxu0 0.0
        %535 = vmatpush1.msra.mxu0 0.0
        %536 = vmatprep.subr.mxu0 0.0
        %537 = vmatpush1.msra.mxu0 0.0
        %538 = vmatprep.subr.mxu0 0.0
        %539 = vmatpush1.msra.mxu0 0.0
        %540 = vmatprep.subr.mxu0 0.0
        %541 = vmatpush1.msra.mxu0 %v329
        %542 = vmatprep.subr.mxu0 0.0
        %543 = vmatpush1.msra.mxu0 %v328
        %544 = vmatprep.subr.mxu0 0.0
        %545 = vmatpush2.msra.mxu0 0.0
        %546 = vmatprep.subr.mxu0 0.0
        %547 = vmatpush2.msra.mxu0 0.0
        %548 = vmatprep.subr.mxu0 0.0
        %549 = vmatpush2.msra.mxu0 0.0
        %550 = vmatprep.subr.mxu0 0.0
        %551 = vmatpush2.msra.mxu0 0.0
        %552 = vmatprep.subr.mxu0 0.0
        %553 = vmatpush2.msra.mxu0 0.0
        %554 = vmatprep.subr.mxu0 0.0
        %555 = vmatpush2.msra.mxu0 0.0
        %556 = vmatprep.subr.mxu0 0.0
        %557 = vmatpush2.msra.mxu0 0.0
        %558 = vmatprep.subr.mxu0 0.0
        %559 = vmatpush2.msra.mxu0 0.0
        %560 = vmatprep.subr.mxu0 0.0
        %561 = vmatpush2.msra.mxu0 0.0
        %562 = vmatprep.subr.mxu0 0.0
        %563 = vmatpush2.msra.mxu0 0.0
        %564 = vmatprep.subr.mxu0 0.0
        %565 = vmatpush2.msra.mxu0 0.0
        %566 = vmatprep.subr.mxu0 0.0
        %567 = vmatpush2.msra.mxu0 0.0
        %568 = vmatprep.subr.mxu0 0.0
        %569 = vmatpush2.msra.mxu0 0.0
        %570 = vmatprep.subr.mxu0 0.0
        %571 = vmatpush2.msra.mxu0 0.0
        %572 = vmatprep.subr.mxu0 0.0
        %573 = vmatpush2.msra.mxu0 0.0
        %574 = vmatprep.subr.mxu0 0.0
        %575 = vmatpush2.msra.mxu0 0.0
        %576 = vmatprep.mubr.f32.mxu0 0.0
        %577 = vmatmul.mubr.f32.gmra.mxu0 %v496
        %v578 = vpop.f32.mrf.mxu0
        %v579 = vadd.f32 %v458, %v578
        %v580 = vpop.f32.mrf.mxu0
        %581 = vmatprep.mubr.f32.mxu0 0.0
        %582 = vmatmul.mubr.f32.gmra.mxu0 %v498
        %v583 = vpop.f32.mrf.mxu0
        %v584 = vadd.f32 %v463, %v583
        %v585 = vpop.f32.mrf.mxu0
        %586 = vmatprep.mubr.f32.mxu0 0.0
        %587 = vmatmul.mubr.f32.gmra.mxu0 %v500
        %v588 = vpop.f32.mrf.mxu0
        %v589 = vadd.f32 %v468, %v588
        %v590 = vpop.f32.mrf.mxu0
        %591 = vmatprep.mubr.f32.mxu0 0.0
        %592 = vmatmul.mubr.f32.gmra.mxu0 %v502
        %v593 = vpop.f32.mrf.mxu0
        %v594 = vadd.f32 %v473, %v593
        %v595 = vpop.f32.mrf.mxu0
        %596 = vmatprep.mubr.f32.mxu0 0.0
        %597 = vmatmul.mubr.f32.gmra.mxu0 %v504
        %v598 = vpop.f32.mrf.mxu0
        %v599 = vadd.f32 %v478, %v598
        %v600 = vpop.f32.mrf.mxu0
        %601 = vmatprep.mubr.f32.mxu0 0.0
        %602 = vmatmul.mubr.f32.gmra.mxu0 %v506
        %v603 = vpop.f32.mrf.mxu0
        %v604 = vadd.f32 %v483, %v603
        %v605 = vpop.f32.mrf.mxu0
        %606 = vmatprep.mubr.f32.mxu0 0.0
        %607 = vmatmul.mubr.f32.gmra.mxu0 %v508
        %v608 = vpop.f32.mrf.mxu0
        %v609 = vadd.f32 %v488, %v608
        %v610 = vpop.f32.mrf.mxu0
        %611 = vmatprep.mubr.f32.mxu0 0.0
        %612 = vmatmul.mubr.f32.gmra.mxu0 %v510
        %v613 = vpop.f32.mrf.mxu0
        %v614 = vadd.f32 %v493, %v613
        %v615 = vpop.f32.mrf.mxu0
        %616 = vdwg.mxu0
        %vm617 = vcmask 1045504
        %v618 = vrot.slane %v312, 2
        %v619 = vrot.slane %v320, 2
        %v620 = vsel %vm617, %v618, %v619
        %v621 = vrot.slane %v313, 2
        %v622 = vrot.slane %v321, 2
        %v623 = vsel %vm617, %v621, %v622
        %v624 = vrot.slane %v314, 2
        %v625 = vrot.slane %v322, 2
        %v626 = vsel %vm617, %v624, %v625
        %v627 = vrot.slane %v315, 2
        %v628 = vrot.slane %v323, 2
        %v629 = vsel %vm617, %v627, %v628
        %v630 = vrot.slane %v316, 2
        %v631 = vrot.slane %v324, 2
        %v632 = vsel %vm617, %v630, %v631
        %v633 = vrot.slane %v317, 2
        %v634 = vrot.slane %v325, 2
        %v635 = vsel %vm617, %v633, %v634
        %v636 = vrot.slane %v318, 2
        %v637 = vrot.slane %v326, 2
        %v638 = vsel %vm617, %v636, %v637
        %v639 = vrot.slane %v319, 2
        %v640 = vrot.slane %v327, 2
        %v641 = vsel %vm617, %v639, %v640
        %s642 = scalar_lea.vmem %s1, 32
        %v643 = vld [vmem:[%s642] sm:$0xff]
        %v644 = vld [vmem:[%s642 + $0x8] sm:$0xff]
        %v645 = vsel %vm374, %v620, 0
        %v647 = vsel %vm374, %v623, 0
        %v649 = vsel %vm374, %v626, 0
        %v651 = vsel %vm374, %v629, 0
        %v653 = vsel %vm374, %v632, 0
        %v655 = vsel %vm374, %v635, 0
        %v657 = vsel %vm374, %v638, 0
        %v659 = vsel %vm374, %v641, 0
        %661 = vmatprep.subr.mxu0 0.0
        %662 = vmatpush1.msra.mxu0 0.0
        %663 = vmatprep.subr.mxu0 0.0
        %664 = vmatpush1.msra.mxu0 0.0
        %665 = vmatprep.subr.mxu0 0.0
        %666 = vmatpush1.msra.mxu0 0.0
        %667 = vmatprep.subr.mxu0 0.0
        %668 = vmatpush1.msra.mxu0 0.0
        %669 = vmatprep.subr.mxu0 0.0
        %670 = vmatpush1.msra.mxu0 0.0
        %671 = vmatprep.subr.mxu0 0.0
        %672 = vmatpush1.msra.mxu0 0.0
        %673 = vmatprep.subr.mxu0 0.0
        %674 = vmatpush1.msra.mxu0 0.0
        %675 = vmatprep.subr.mxu0 0.0
        %676 = vmatpush1.msra.mxu0 0.0
        %677 = vmatprep.subr.mxu0 0.0
        %678 = vmatpush1.msra.mxu0 0.0
        %679 = vmatprep.subr.mxu0 0.0
        %680 = vmatpush1.msra.mxu0 0.0
        %681 = vmatprep.subr.mxu0 0.0
        %682 = vmatpush1.msra.mxu0 0.0
        %683 = vmatprep.subr.mxu0 0.0
        %684 = vmatpush1.msra.mxu0 0.0
        %685 = vmatprep.subr.mxu0 0.0
        %686 = vmatpush1.msra.mxu0 0.0
        %687 = vmatprep.subr.mxu0 0.0
        %688 = vmatpush1.msra.mxu0 0.0
        %689 = vmatprep.subr.mxu0 0.0
        %690 = vmatpush1.msra.mxu0 %v644
        %691 = vmatprep.subr.mxu0 0.0
        %692 = vmatpush1.msra.mxu0 %v643
        %693 = vmatprep.subr.mxu0 0.0
        %694 = vmatpush2.msra.mxu0 0.0
        %695 = vmatprep.subr.mxu0 0.0
        %696 = vmatpush2.msra.mxu0 0.0
        %697 = vmatprep.subr.mxu0 0.0
        %698 = vmatpush2.msra.mxu0 0.0
        %699 = vmatprep.subr.mxu0 0.0
        %700 = vmatpush2.msra.mxu0 0.0
        %701 = vmatprep.subr.mxu0 0.0
        %702 = vmatpush2.msra.mxu0 0.0
        %703 = vmatprep.subr.mxu0 0.0
        %704 = vmatpush2.msra.mxu0 0.0
        %705 = vmatprep.subr.mxu0 0.0
        %706 = vmatpush2.msra.mxu0 0.0
        %707 = vmatprep.subr.mxu0 0.0
        %708 = vmatpush2.msra.mxu0 0.0
        %709 = vmatprep.subr.mxu0 0.0
        %710 = vmatpush2.msra.mxu0 0.0
        %711 = vmatprep.subr.mxu0 0.0
        %712 = vmatpush2.msra.mxu0 0.0
        %713 = vmatprep.subr.mxu0 0.0
        %714 = vmatpush2.msra.mxu0 0.0
        %715 = vmatprep.subr.mxu0 0.0
        %716 = vmatpush2.msra.mxu0 0.0
        %717 = vmatprep.subr.mxu0 0.0
        %718 = vmatpush2.msra.mxu0 0.0
        %719 = vmatprep.subr.mxu0 0.0
        %720 = vmatpush2.msra.mxu0 0.0
        %721 = vmatprep.subr.mxu0 0.0
        %722 = vmatpush2.msra.mxu0 0.0
        %723 = vmatprep.subr.mxu0 0.0
        %724 = vmatpush2.msra.mxu0 0.0
        %725 = vmatprep.mubr.f32.mxu0 0.0
        %726 = vmatmul.mubr.f32.gmra.mxu0 %v645
        %v727 = vpop.f32.mrf.mxu0
        %v728 = vadd.f32 0.0, %v727
        %v729 = vpop.f32.mrf.mxu0
        %730 = vmatprep.mubr.f32.mxu0 0.0
        %731 = vmatmul.mubr.f32.gmra.mxu0 %v647
        %v732 = vpop.f32.mrf.mxu0
        %v733 = vadd.f32 0.0, %v732
        %v734 = vpop.f32.mrf.mxu0
        %735 = vmatprep.mubr.f32.mxu0 0.0
        %736 = vmatmul.mubr.f32.gmra.mxu0 %v649
        %v737 = vpop.f32.mrf.mxu0
        %v738 = vadd.f32 0.0, %v737
        %v739 = vpop.f32.mrf.mxu0
        %740 = vmatprep.mubr.f32.mxu0 0.0
        %741 = vmatmul.mubr.f32.gmra.mxu0 %v651
        %v742 = vpop.f32.mrf.mxu0
        %v743 = vadd.f32 0.0, %v742
        %v744 = vpop.f32.mrf.mxu0
        %745 = vmatprep.mubr.f32.mxu0 0.0
        %746 = vmatmul.mubr.f32.gmra.mxu0 %v653
        %v747 = vpop.f32.mrf.mxu0
        %v748 = vadd.f32 0.0, %v747
        %v749 = vpop.f32.mrf.mxu0
        %750 = vmatprep.mubr.f32.mxu0 0.0
        %751 = vmatmul.mubr.f32.gmra.mxu0 %v655
        %v752 = vpop.f32.mrf.mxu0
        %v753 = vadd.f32 0.0, %v752
        %v754 = vpop.f32.mrf.mxu0
        %755 = vmatprep.mubr.f32.mxu0 0.0
        %756 = vmatmul.mubr.f32.gmra.mxu0 %v657
        %v757 = vpop.f32.mrf.mxu0
        %v758 = vadd.f32 0.0, %v757
        %v759 = vpop.f32.mrf.mxu0
        %760 = vmatprep.mubr.f32.mxu0 0.0
        %761 = vmatmul.mubr.f32.gmra.mxu0 %v659
        %v762 = vpop.f32.mrf.mxu0
        %v763 = vadd.f32 0.0, %v762
        %v764 = vpop.f32.mrf.mxu0
        %765 = vdwg.mxu0
        %v766 = vadd.f32 %v579, %v728
        %v767 = vadd.f32 %v584, %v733
        %v768 = vadd.f32 %v589, %v738
        %v769 = vadd.f32 %v594, %v743
        %v770 = vadd.f32 %v599, %v748
        %v771 = vadd.f32 %v604, %v753
        %v772 = vadd.f32 %v609, %v758
        %v773 = vadd.f32 %v614, %v763
        %v774 = vld [vmem:[%s2] sm:$0x1]
        %v776 = vlaneseq
        %v777 = vshrl.u32 %v776, 7
        %v778 = vsub.s32 0, %v777
        %v779 = vrot.slane %v774, %v778
        %v781 = vadd.f32 %v766, %v779
        %v782 = vadd.f32 %v767, %v779
        %v783 = vadd.f32 %v768, %v779
        %v784 = vadd.f32 %v769, %v779
        %v785 = vadd.f32 %v770, %v779
        %v786 = vadd.f32 %v771, %v779
        %v787 = vadd.f32 %v772, %v779
        %v788 = vadd.f32 %v773, %v779
        %v789 = vmax.f32 %v781, 0.0
        %v790 = vmax.f32 %v782, 0.0
        %v791 = vmax.f32 %v783, 0.0
        %v792 = vmax.f32 %v784, 0.0
        %v793 = vmax.f32 %v785, 0.0
        %v794 = vmax.f32 %v786, 0.0
        %v795 = vmax.f32 %v787, 0.0
        %v796 = vmax.f32 %v788, 0.0
        %v805 = vrot.slane %v789, 7
        %v806 = vrot.slane %v790, 7
        %v807 = vrot.slane %v791, 7
        %v808 = vrot.slane %v792, 7
        %v809 = vrot.slane %v793, 7
        %v810 = vrot.slane %v794, 7
        %v811 = vrot.slane %v795, 7
        %v812 = vrot.slane %v796, 7
        %v821 = vsel %vm311, 0.0, %v805
        %v822 = vsel %vm311, 0.0, %v806
        %v823 = vsel %vm311, 0.0, %v807
        %v824 = vsel %vm311, 0.0, %v808
        %v825 = vsel %vm311, 0.0, %v809
        %v826 = vsel %vm311, 0.0, %v810
        %v827 = vsel %vm311, 0.0, %v811
        %v828 = vsel %vm311, 0.0, %v812
        %v829 = vsel %vm311, %v805, 0.0
        %v830 = vsel %vm311, %v806, 0.0
        %v831 = vsel %vm311, %v807, 0.0
        %v832 = vsel %vm311, %v808, 0.0
        %v833 = vsel %vm311, %v809, 0.0
        %v834 = vsel %vm311, %v810, 0.0
        %v835 = vsel %vm311, %v811, 0.0
        %v836 = vsel %vm311, %v812, 0.0
        %v837 = vld [vmem:[%s3] sm:$0xff]
        %v838 = vld [vmem:[%s3 + $0x8] sm:$0xff]
        %v839 = vld [vmem:[%s3 + $0x10] sm:$0xff]
        %v840 = vld [vmem:[%s3 + $0x18] sm:$0xff]
        %v857 = vrot.slane %v821, 1
        %v858 = vrot.slane %v829, 1
        %v859 = vsel %vm346, %v857, %v858
        %v860 = vrot.slane %v822, 1
        %v861 = vrot.slane %v830, 1
        %v862 = vsel %vm346, %v860, %v861
        %v863 = vrot.slane %v823, 1
        %v864 = vrot.slane %v831, 1
        %v865 = vsel %vm346, %v863, %v864
        %v866 = vrot.slane %v824, 1
        %v867 = vrot.slane %v832, 1
        %v868 = vsel %vm346, %v866, %v867
        %v869 = vrot.slane %v825, 1
        %v870 = vrot.slane %v833, 1
        %v871 = vsel %vm346, %v869, %v870
        %v872 = vrot.slane %v826, 1
        %v873 = vrot.slane %v834, 1
        %v874 = vsel %vm346, %v872, %v873
        %v875 = vrot.slane %v827, 1
        %v876 = vrot.slane %v835, 1
        %v877 = vsel %vm346, %v875, %v876
        %v878 = vrot.slane %v828, 1
        %v879 = vrot.slane %v836, 1
        %v880 = vsel %vm346, %v878, %v879
        %s881 = scalar_lea.vmem %s3, 32
        %v882 = vld [vmem:[%s881] sm:$0xff]
        %v883 = vld [vmem:[%s881 + $0x8] sm:$0xff]
        %v884 = vld [vmem:[%s881 + $0x10] sm:$0xff]
        %v885 = vld [vmem:[%s881 + $0x18] sm:$0xff]
        %vm886 = vcmask 261120
        %v887 = vsel %vm886, %v859, 0
        %v889 = vsel %vm886, %v862, 0
        %v891 = vsel %vm886, %v865, 0
        %v893 = vsel %vm886, %v868, 0
        %v895 = vsel %vm886, %v871, 0
        %v897 = vsel %vm886, %v874, 0
        %v899 = vsel %vm886, %v877, 0
        %v901 = vsel %vm886, %v880, 0
        %903 = vmatprep.subr.mxu0 0.0
        %904 = vmatpush1.msra.mxu0 0.0
        %905 = vmatprep.subr.mxu0 0.0
        %906 = vmatpush1.msra.mxu0 0.0
        %907 = vmatprep.subr.mxu0 0.0
        %908 = vmatpush1.msra.mxu0 0.0
        %909 = vmatprep.subr.mxu0 0.0
        %910 = vmatpush1.msra.mxu0 0.0
        %911 = vmatprep.subr.mxu0 0.0
        %912 = vmatpush1.msra.mxu0 0.0
        %913 = vmatprep.subr.mxu0 0.0
        %914 = vmatpush1.msra.mxu0 0.0
        %915 = vmatprep.subr.mxu0 0.0
        %916 = vmatpush1.msra.mxu0 0.0
        %917 = vmatprep.subr.mxu0 0.0
        %918 = vmatpush1.msra.mxu0 0.0
        %919 = vmatprep.subr.mxu0 0.0
        %920 = vmatpush1.msra.mxu0 0.0
        %921 = vmatprep.subr.mxu0 0.0
        %922 = vmatpush1.msra.mxu0 0.0
        %923 = vmatprep.subr.mxu0 0.0
        %924 = vmatpush1.msra.mxu0 0.0
        %925 = vmatprep.subr.mxu0 0.0
        %926 = vmatpush1.msra.mxu0 0.0
        %927 = vmatprep.subr.mxu0 0.0
        %928 = vmatpush1.msra.mxu0 %v885
        %929 = vmatprep.subr.mxu0 0.0
        %930 = vmatpush1.msra.mxu0 %v884
        %931 = vmatprep.subr.mxu0 0.0
        %932 = vmatpush1.msra.mxu0 %v883
        %933 = vmatprep.subr.mxu0 0.0
        %934 = vmatpush1.msra.mxu0 %v882
        %935 = vmatprep.subr.mxu0 0.0
        %936 = vmatpush2.msra.mxu0 0.0
        %937 = vmatprep.subr.mxu0 0.0
        %938 = vmatpush2.msra.mxu0 0.0
        %939 = vmatprep.subr.mxu0 0.0
        %940 = vmatpush2.msra.mxu0 0.0
        %941 = vmatprep.subr.mxu0 0.0
        %942 = vmatpush2.msra.mxu0 0.0
        %943 = vmatprep.subr.mxu0 0.0
        %944 = vmatpush2.msra.mxu0 0.0
        %945 = vmatprep.subr.mxu0 0.0
        %946 = vmatpush2.msra.mxu0 0.0
        %947 = vmatprep.subr.mxu0 0.0
        %948 = vmatpush2.msra.mxu0 0.0
        %949 = vmatprep.subr.mxu0 0.0
        %950 = vmatpush2.msra.mxu0 0.0
        %951 = vmatprep.subr.mxu0 0.0
        %952 = vmatpush2.msra.mxu0 0.0
        %953 = vmatprep.subr.mxu0 0.0
        %954 = vmatpush2.msra.mxu0 0.0
        %955 = vmatprep.subr.mxu0 0.0
        %956 = vmatpush2.msra.mxu0 0.0
        %957 = vmatprep.subr.mxu0 0.0
        %958 = vmatpush2.msra.mxu0 0.0
        %959 = vmatprep.subr.mxu0 0.0
        %960 = vmatpush2.msra.mxu0 0.0
        %961 = vmatprep.subr.mxu0 0.0
        %962 = vmatpush2.msra.mxu0 0.0
        %963 = vmatprep.subr.mxu0 0.0
        %964 = vmatpush2.msra.mxu0 0.0
        %965 = vmatprep.subr.mxu0 0.0
        %966 = vmatpush2.msra.mxu0 0.0
        %967 = vmatprep.mubr.f32.mxu0 0.0
        %968 = vmatmul.mubr.f32.gmra.mxu0 %v887
        %v969 = vpop.f32.mrf.mxu0
        %v970 = vadd.f32 0.0, %v969
        %v971 = vpop.f32.mrf.mxu0
        %972 = vmatprep.mubr.f32.mxu0 0.0
        %973 = vmatmul.mubr.f32.gmra.mxu0 %v889
        %v974 = vpop.f32.mrf.mxu0
        %v975 = vadd.f32 0.0, %v974
        %v976 = vpop.f32.mrf.mxu0
        %977 = vmatprep.mubr.f32.mxu0 0.0
        %978 = vmatmul.mubr.f32.gmra.mxu0 %v891
        %v979 = vpop.f32.mrf.mxu0
        %v980 = vadd.f32 0.0, %v979
        %v981 = vpop.f32.mrf.mxu0
        %982 = vmatprep.mubr.f32.mxu0 0.0
        %983 = vmatmul.mubr.f32.gmra.mxu0 %v893
        %v984 = vpop.f32.mrf.mxu0
        %v985 = vadd.f32 0.0, %v984
        %v986 = vpop.f32.mrf.mxu0
        %987 = vmatprep.mubr.f32.mxu0 0.0
        %988 = vmatmul.mubr.f32.gmra.mxu0 %v895
        %v989 = vpop.f32.mrf.mxu0
        %v990 = vadd.f32 0.0, %v989
        %v991 = vpop.f32.mrf.mxu0
        %992 = vmatprep.mubr.f32.mxu0 0.0
        %993 = vmatmul.mubr.f32.gmra.mxu0 %v897
        %v994 = vpop.f32.mrf.mxu0
        %v995 = vadd.f32 0.0, %v994
        %v996 = vpop.f32.mrf.mxu0
        %997 = vmatprep.mubr.f32.mxu0 0.0
        %998 = vmatmul.mubr.f32.gmra.mxu0 %v899
        %v999 = vpop.f32.mrf.mxu0
        %v1000 = vadd.f32 0.0, %v999
        %v1001 = vpop.f32.mrf.mxu0
        %1002 = vmatprep.mubr.f32.mxu0 0.0
        %1003 = vmatmul.mubr.f32.gmra.mxu0 %v901
        %v1004 = vpop.f32.mrf.mxu0
        %v1005 = vadd.f32 0.0, %v1004
        %v1006 = vpop.f32.mrf.mxu0
        %1007 = vdwg.mxu0
        %v1008 = vsel %vm886, %v821, 0
        %v1010 = vsel %vm886, %v822, 0
        %v1012 = vsel %vm886, %v823, 0
        %v1014 = vsel %vm886, %v824, 0
        %v1016 = vsel %vm886, %v825, 0
        %v1018 = vsel %vm886, %v826, 0
        %v1020 = vsel %vm886, %v827, 0
        %v1022 = vsel %vm886, %v828, 0
        %1024 = vmatprep.subr.mxu0 0.0
        %1025 = vmatpush1.msra.mxu0 0.0
        %1026 = vmatprep.subr.mxu0 0.0
        %1027 = vmatpush1.msra.mxu0 0.0
        %1028 = vmatprep.subr.mxu0 0.0
        %1029 = vmatpush1.msra.mxu0 0.0
        %1030 = vmatprep.subr.mxu0 0.0
        %1031 = vmatpush1.msra.mxu0 0.0
        %1032 = vmatprep.subr.mxu0 0.0
        %1033 = vmatpush1.msra.mxu0 0.0
        %1034 = vmatprep.subr.mxu0 0.0
        %1035 = vmatpush1.msra.mxu0 0.0
        %1036 = vmatprep.subr.mxu0 0.0
        %1037 = vmatpush1.msra.mxu0 0.0
        %1038 = vmatprep.subr.mxu0 0.0
        %1039 = vmatpush1.msra.mxu0 0.0
        %1040 = vmatprep.subr.mxu0 0.0
        %1041 = vmatpush1.msra.mxu0 0.0
        %1042 = vmatprep.subr.mxu0 0.0
        %1043 = vmatpush1.msra.mxu0 0.0
        %1044 = vmatprep.subr.mxu0 0.0
        %1045 = vmatpush1.msra.mxu0 0.0
        %1046 = vmatprep.subr.mxu0 0.0
        %1047 = vmatpush1.msra.mxu0 0.0
        %1048 = vmatprep.subr.mxu0 0.0
        %1049 = vmatpush1.msra.mxu0 %v840
        %1050 = vmatprep.subr.mxu0 0.0
        %1051 = vmatpush1.msra.mxu0 %v839
        %1052 = vmatprep.subr.mxu0 0.0
        %1053 = vmatpush1.msra.mxu0 %v838
        %1054 = vmatprep.subr.mxu0 0.0
        %1055 = vmatpush1.msra.mxu0 %v837
        %1056 = vmatprep.subr.mxu0 0.0
        %1057 = vmatpush2.msra.mxu0 0.0
        %1058 = vmatprep.subr.mxu0 0.0
        %1059 = vmatpush2.msra.mxu0 0.0
        %1060 = vmatprep.subr.mxu0 0.0
        %1061 = vmatpush2.msra.mxu0 0.0
        %1062 = vmatprep.subr.mxu0 0.0
        %1063 = vmatpush2.msra.mxu0 0.0
        %1064 = vmatprep.subr.mxu0 0.0
        %1065 = vmatpush2.msra.mxu0 0.0
        %1066 = vmatprep.subr.mxu0 0.0
        %1067 = vmatpush2.msra.mxu0 0.0
        %1068 = vmatprep.subr.mxu0 0.0
        %1069 = vmatpush2.msra.mxu0 0.0
        %1070 = vmatprep.subr.mxu0 0.0
        %1071 = vmatpush2.msra.mxu0 0.0
        %1072 = vmatprep.subr.mxu0 0.0
        %1073 = vmatpush2.msra.mxu0 0.0
        %1074 = vmatprep.subr.mxu0 0.0
        %1075 = vmatpush2.msra.mxu0 0.0
        %1076 = vmatprep.subr.mxu0 0.0
        %1077 = vmatpush2.msra.mxu0 0.0
        %1078 = vmatprep.subr.mxu0 0.0
        %1079 = vmatpush2.msra.mxu0 0.0
        %1080 = vmatprep.subr.mxu0 0.0
        %1081 = vmatpush2.msra.mxu0 0.0
        %1082 = vmatprep.subr.mxu0 0.0
        %1083 = vmatpush2.msra.mxu0 0.0
        %1084 = vmatprep.subr.mxu0 0.0
        %1085 = vmatpush2.msra.mxu0 0.0
        %1086 = vmatprep.subr.mxu0 0.0
        %1087 = vmatpush2.msra.mxu0 0.0
        %1088 = vmatprep.mubr.f32.mxu0 0.0
        %1089 = vmatmul.mubr.f32.gmra.mxu0 %v1008
        %v1090 = vpop.f32.mrf.mxu0
        %v1091 = vadd.f32 %v970, %v1090
        %v1092 = vpop.f32.mrf.mxu0
        %1093 = vmatprep.mubr.f32.mxu0 0.0
        %1094 = vmatmul.mubr.f32.gmra.mxu0 %v1010
        %v1095 = vpop.f32.mrf.mxu0
        %v1096 = vadd.f32 %v975, %v1095
        %v1097 = vpop.f32.mrf.mxu0
        %1098 = vmatprep.mubr.f32.mxu0 0.0
        %1099 = vmatmul.mubr.f32.gmra.mxu0 %v1012
        %v1100 = vpop.f32.mrf.mxu0
        %v1101 = vadd.f32 %v980, %v1100
        %v1102 = vpop.f32.mrf.mxu0
        %1103 = vmatprep.mubr.f32.mxu0 0.0
        %1104 = vmatmul.mubr.f32.gmra.mxu0 %v1014
        %v1105 = vpop.f32.mrf.mxu0
        %v1106 = vadd.f32 %v985, %v1105
        %v1107 = vpop.f32.mrf.mxu0
        %1108 = vmatprep.mubr.f32.mxu0 0.0
        %1109 = vmatmul.mubr.f32.gmra.mxu0 %v1016
        %v1110 = vpop.f32.mrf.mxu0
        %v1111 = vadd.f32 %v990, %v1110
        %v1112 = vpop.f32.mrf.mxu0
        %1113 = vmatprep.mubr.f32.mxu0 0.0
        %1114 = vmatmul.mubr.f32.gmra.mxu0 %v1018
        %v1115 = vpop.f32.mrf.mxu0
        %v1116 = vadd.f32 %v995, %v1115
        %v1117 = vpop.f32.mrf.mxu0
        %1118 = vmatprep.mubr.f32.mxu0 0.0
        %1119 = vmatmul.mubr.f32.gmra.mxu0 %v1020
        %v1120 = vpop.f32.mrf.mxu0
        %v1121 = vadd.f32 %v1000, %v1120
        %v1122 = vpop.f32.mrf.mxu0
        %1123 = vmatprep.mubr.f32.mxu0 0.0
        %1124 = vmatmul.mubr.f32.gmra.mxu0 %v1022
        %v1125 = vpop.f32.mrf.mxu0
        %v1126 = vadd.f32 %v1005, %v1125
        %v1127 = vpop.f32.mrf.mxu0
        %1128 = vdwg.mxu0
        %v1129 = vrot.slane %v821, 2
        %v1130 = vrot.slane %v829, 2
        %v1131 = vsel %vm617, %v1129, %v1130
        %v1132 = vrot.slane %v822, 2
        %v1133 = vrot.slane %v830, 2
        %v1134 = vsel %vm617, %v1132, %v1133
        %v1135 = vrot.slane %v823, 2
        %v1136 = vrot.slane %v831, 2
        %v1137 = vsel %vm617, %v1135, %v1136
        %v1138 = vrot.slane %v824, 2
        %v1139 = vrot.slane %v832, 2
        %v1140 = vsel %vm617, %v1138, %v1139
        %v1141 = vrot.slane %v825, 2
        %v1142 = vrot.slane %v833, 2
        %v1143 = vsel %vm617, %v1141, %v1142
        %v1144 = vrot.slane %v826, 2
        %v1145 = vrot.slane %v834, 2
        %v1146 = vsel %vm617, %v1144, %v1145
        %v1147 = vrot.slane %v827, 2
        %v1148 = vrot.slane %v835, 2
        %v1149 = vsel %vm617, %v1147, %v1148
        %v1150 = vrot.slane %v828, 2
        %v1151 = vrot.slane %v836, 2
        %v1152 = vsel %vm617, %v1150, %v1151
        %s1153 = scalar_lea.vmem %s3, 64
        %v1154 = vld [vmem:[%s1153] sm:$0xff]
        %v1155 = vld [vmem:[%s1153 + $0x8] sm:$0xff]
        %v1156 = vld [vmem:[%s1153 + $0x10] sm:$0xff]
        %v1157 = vld [vmem:[%s1153 + $0x18] sm:$0xff]
        %v1158 = vsel %vm886, %v1131, 0
        %v1160 = vsel %vm886, %v1134, 0
        %v1162 = vsel %vm886, %v1137, 0
        %v1164 = vsel %vm886, %v1140, 0
        %v1166 = vsel %vm886, %v1143, 0
        %v1168 = vsel %vm886, %v1146, 0
        %v1170 = vsel %vm886, %v1149, 0
        %v1172 = vsel %vm886, %v1152, 0
        %1174 = vmatprep.subr.mxu0 0.0
        %1175 = vmatpush1.msra.mxu0 0.0
        %1176 = vmatprep.subr.mxu0 0.0
        %1177 = vmatpush1.msra.mxu0 0.0
        %1178 = vmatprep.subr.mxu0 0.0
        %1179 = vmatpush1.msra.mxu0 0.0
        %1180 = vmatprep.subr.mxu0 0.0
        %1181 = vmatpush1.msra.mxu0 0.0
        %1182 = vmatprep.subr.mxu0 0.0
        %1183 = vmatpush1.msra.mxu0 0.0
        %1184 = vmatprep.subr.mxu0 0.0
        %1185 = vmatpush1.msra.mxu0 0.0
        %1186 = vmatprep.subr.mxu0 0.0
        %1187 = vmatpush1.msra.mxu0 0.0
        %1188 = vmatprep.subr.mxu0 0.0
        %1189 = vmatpush1.msra.mxu0 0.0
        %1190 = vmatprep.subr.mxu0 0.0
        %1191 = vmatpush1.msra.mxu0 0.0
        %1192 = vmatprep.subr.mxu0 0.0
        %1193 = vmatpush1.msra.mxu0 0.0
        %1194 = vmatprep.subr.mxu0 0.0
        %1195 = vmatpush1.msra.mxu0 0.0
        %1196 = vmatprep.subr.mxu0 0.0
        %1197 = vmatpush1.msra.mxu0 0.0
        %1198 = vmatprep.subr.mxu0 0.0
        %1199 = vmatpush1.msra.mxu0 %v1157
        %1200 = vmatprep.subr.mxu0 0.0
        %1201 = vmatpush1.msra.mxu0 %v1156
        %1202 = vmatprep.subr.mxu0 0.0
        %1203 = vmatpush1.msra.mxu0 %v1155
        %1204 = vmatprep.subr.mxu0 0.0
        %1205 = vmatpush1.msra.mxu0 %v1154
        %1206 = vmatprep.subr.mxu0 0.0
        %1207 = vmatpush2.msra.mxu0 0.0
        %1208 = vmatprep.subr.mxu0 0.0
        %1209 = vmatpush2.msra.mxu0 0.0
        %1210 = vmatprep.subr.mxu0 0.0
        %1211 = vmatpush2.msra.mxu0 0.0
        %1212 = vmatprep.subr.mxu0 0.0
        %1213 = vmatpush2.msra.mxu0 0.0
        %1214 = vmatprep.subr.mxu0 0.0
        %1215 = vmatpush2.msra.mxu0 0.0
        %1216 = vmatprep.subr.mxu0 0.0
        %1217 = vmatpush2.msra.mxu0 0.0
        %1218 = vmatprep.subr.mxu0 0.0
        %1219 = vmatpush2.msra.mxu0 0.0
        %1220 = vmatprep.subr.mxu0 0.0
        %1221 = vmatpush2.msra.mxu0 0.0
        %1222 = vmatprep.subr.mxu0 0.0
        %1223 = vmatpush2.msra.mxu0 0.0
        %1224 = vmatprep.subr.mxu0 0.0
        %1225 = vmatpush2.msra.mxu0 0.0
        %1226 = vmatprep.subr.mxu0 0.0
        %1227 = vmatpush2.msra.mxu0 0.0
        %1228 = vmatprep.subr.mxu0 0.0
        %1229 = vmatpush2.msra.mxu0 0.0
        %1230 = vmatprep.subr.mxu0 0.0
        %1231 = vmatpush2.msra.mxu0 0.0
        %1232 = vmatprep.subr.mxu0 0.0
        %1233 = vmatpush2.msra.mxu0 0.0
        %1234 = vmatprep.subr.mxu0 0.0
        %1235 = vmatpush2.msra.mxu0 0.0
        %1236 = vmatprep.subr.mxu0 0.0
        %1237 = vmatpush2.msra.mxu0 0.0
        %1238 = vmatprep.mubr.f32.mxu0 0.0
        %1239 = vmatmul.mubr.f32.gmra.mxu0 %v1158
        %v1240 = vpop.f32.mrf.mxu0
        %v1241 = vadd.f32 0.0, %v1240
        %v1242 = vpop.f32.mrf.mxu0
        %1243 = vmatprep.mubr.f32.mxu0 0.0
        %1244 = vmatmul.mubr.f32.gmra.mxu0 %v1160
        %v1245 = vpop.f32.mrf.mxu0
        %v1246 = vadd.f32 0.0, %v1245
        %v1247 = vpop.f32.mrf.mxu0
        %1248 = vmatprep.mubr.f32.mxu0 0.0
        %1249 = vmatmul.mubr.f32.gmra.mxu0 %v1162
        %v1250 = vpop.f32.mrf.mxu0
        %v1251 = vadd.f32 0.0, %v1250
        %v1252 = vpop.f32.mrf.mxu0
        %1253 = vmatprep.mubr.f32.mxu0 0.0
        %1254 = vmatmul.mubr.f32.gmra.mxu0 %v1164
        %v1255 = vpop.f32.mrf.mxu0
        %v1256 = vadd.f32 0.0, %v1255
        %v1257 = vpop.f32.mrf.mxu0
        %1258 = vmatprep.mubr.f32.mxu0 0.0
        %1259 = vmatmul.mubr.f32.gmra.mxu0 %v1166
        %v1260 = vpop.f32.mrf.mxu0
        %v1261 = vadd.f32 0.0, %v1260
        %v1262 = vpop.f32.mrf.mxu0
        %1263 = vmatprep.mubr.f32.mxu0 0.0
        %1264 = vmatmul.mubr.f32.gmra.mxu0 %v1168
        %v1265 = vpop.f32.mrf.mxu0
        %v1266 = vadd.f32 0.0, %v1265
        %v1267 = vpop.f32.mrf.mxu0
        %1268 = vmatprep.mubr.f32.mxu0 0.0
        %1269 = vmatmul.mubr.f32.gmra.mxu0 %v1170
        %v1270 = vpop.f32.mrf.mxu0
        %v1271 = vadd.f32 0.0, %v1270
        %v1272 = vpop.f32.mrf.mxu0
        %1273 = vmatprep.mubr.f32.mxu0 0.0
        %1274 = vmatmul.mubr.f32.gmra.mxu0 %v1172
        %v1275 = vpop.f32.mrf.mxu0
        %v1276 = vadd.f32 0.0, %v1275
        %v1277 = vpop.f32.mrf.mxu0
        %1278 = vdwg.mxu0
        %v1279 = vadd.f32 %v1091, %v1241
        %v1280 = vadd.f32 %v1096, %v1246
        %v1281 = vadd.f32 %v1101, %v1251
        %v1282 = vadd.f32 %v1106, %v1256
        %v1283 = vadd.f32 %v1111, %v1261
        %v1284 = vadd.f32 %v1116, %v1266
        %v1285 = vadd.f32 %v1121, %v1271
        %v1286 = vadd.f32 %v1126, %v1276
        %v1287 = vld [vmem:[%s4] sm:$0x1]
        %v1289 = vlaneseq
        %v1290 = vshrl.u32 %v1289, 7
        %v1291 = vsub.s32 0, %v1290
        %v1292 = vrot.slane %v1287, %v1291
        %v1294 = vadd.f32 %v1279, %v1292
        %v1295 = vadd.f32 %v1280, %v1292
        %v1296 = vadd.f32 %v1281, %v1292
        %v1297 = vadd.f32 %v1282, %v1292
        %v1298 = vadd.f32 %v1283, %v1292
        %v1299 = vadd.f32 %v1284, %v1292
        %v1300 = vadd.f32 %v1285, %v1292
        %v1301 = vadd.f32 %v1286, %v1292
        %v1302 = vmax.f32 %v1294, 0.0
        %v1303 = vmax.f32 %v1295, 0.0
        %v1304 = vmax.f32 %v1296, 0.0
        %v1305 = vmax.f32 %v1297, 0.0
        %v1306 = vmax.f32 %v1298, 0.0
        %v1307 = vmax.f32 %v1299, 0.0
        %v1308 = vmax.f32 %v1300, 0.0
        %v1309 = vmax.f32 %v1301, 0.0
        %v1310 = vld [vmem:[%s5] sm:$0xff]
        %v1311 = vld [vmem:[%s5 + $0x8] sm:$0xff]
        %s1312 = scalar_lea.vmem %s5, 16
        %v1313 = vld [vmem:[%s1312] sm:$0xff]
        %v1314 = vld [vmem:[%s1312 + $0x8] sm:$0xff]
        %v1323 = vrot.slane %v1302, 1
        %vm1324 = vcmask 1041409
        %v1325 = vsel %vm1324, %v1303, %v1323
        %v1326 = vrot.slane %v1304, 7
        %vm1327 = vcmask 1042434
        %v1328 = vsel %vm1327, %v1326, %v1325
        %v1329 = vrot.slane %v1305, 6
        %vm1330 = vcmask 1043459
        %v1331 = vsel %vm1330, %v1329, %v1328
        %v1332 = vrot.slane %v1306, 5
        %vm1333 = vcmask 1044484
        %v1334 = vsel %vm1333, %v1332, %v1331
        %v1335 = vrot.slane %v1307, 4
        %vm1336 = vcmask 1045509
        %v1337 = vsel %vm1336, %v1335, %v1334
        %v1338 = vrot.slane %v1308, 3
        %vm1339 = vcmask 1046534
        %v1340 = vsel %vm1339, %v1338, %v1337
        %v1341 = vrot.slane %v1309, 2
        %vm1342 = vcmask 1047559
        %v1343 = vsel %vm1342, %v1341, %v1340
        %v1344 = vsel %vm374, %v1343, 0
        %1346 = vmatprep.subr.mxu0 0.0
        %1347 = vmatpush1.msra.mxu0 0.0
        %1348 = vmatprep.subr.mxu0 0.0
        %1349 = vmatpush1.msra.mxu0 0.0
        %1350 = vmatprep.subr.mxu0 0.0
        %1351 = vmatpush1.msra.mxu0 0.0
        %1352 = vmatprep.subr.mxu0 0.0
        %1353 = vmatpush1.msra.mxu0 0.0
        %1354 = vmatprep.subr.mxu0 0.0
        %1355 = vmatpush1.msra.mxu0 0.0
        %1356 = vmatprep.subr.mxu0 0.0
        %1357 = vmatpush1.msra.mxu0 0.0
        %1358 = vmatprep.subr.mxu0 0.0
        %1359 = vmatpush1.msra.mxu0 0.0
        %1360 = vmatprep.subr.mxu0 0.0
        %1361 = vmatpush1.msra.mxu0 0.0
        %1362 = vmatprep.subr.mxu0 0.0
        %1363 = vmatpush1.msra.mxu0 0.0
        %1364 = vmatprep.subr.mxu0 0.0
        %1365 = vmatpush1.msra.mxu0 0.0
        %1366 = vmatprep.subr.mxu0 0.0
        %1367 = vmatpush1.msra.mxu0 0.0
        %1368 = vmatprep.subr.mxu0 0.0
        %1369 = vmatpush1.msra.mxu0 0.0
        %1370 = vmatprep.subr.mxu0 0.0
        %1371 = vmatpush1.msra.mxu0 0.0
        %1372 = vmatprep.subr.mxu0 0.0
        %1373 = vmatpush1.msra.mxu0 0.0
        %1374 = vmatprep.subr.mxu0 0.0
        %1375 = vmatpush1.msra.mxu0 %v1314
        %1376 = vmatprep.subr.mxu0 0.0
        %1377 = vmatpush1.msra.mxu0 %v1313
        %1378 = vmatprep.subr.mxu0 0.0
        %1379 = vmatpush2.msra.mxu0 0.0
        %1380 = vmatprep.subr.mxu0 0.0
        %1381 = vmatpush2.msra.mxu0 0.0
        %1382 = vmatprep.subr.mxu0 0.0
        %1383 = vmatpush2.msra.mxu0 0.0
        %1384 = vmatprep.subr.mxu0 0.0
        %1385 = vmatpush2.msra.mxu0 0.0
        %1386 = vmatprep.subr.mxu0 0.0
        %1387 = vmatpush2.msra.mxu0 0.0
        %1388 = vmatprep.subr.mxu0 0.0
        %1389 = vmatpush2.msra.mxu0 0.0
        %1390 = vmatprep.subr.mxu0 0.0
        %1391 = vmatpush2.msra.mxu0 0.0
        %1392 = vmatprep.subr.mxu0 0.0
        %1393 = vmatpush2.msra.mxu0 0.0
        %1394 = vmatprep.subr.mxu0 0.0
        %1395 = vmatpush2.msra.mxu0 0.0
        %1396 = vmatprep.subr.mxu0 0.0
        %1397 = vmatpush2.msra.mxu0 0.0
        %1398 = vmatprep.subr.mxu0 0.0
        %1399 = vmatpush2.msra.mxu0 0.0
        %1400 = vmatprep.subr.mxu0 0.0
        %1401 = vmatpush2.msra.mxu0 0.0
        %1402 = vmatprep.subr.mxu0 0.0
        %1403 = vmatpush2.msra.mxu0 0.0
        %1404 = vmatprep.subr.mxu0 0.0
        %1405 = vmatpush2.msra.mxu0 0.0
        %1406 = vmatprep.subr.mxu0 0.0
        %1407 = vmatpush2.msra.mxu0 0.0
        %1408 = vmatprep.subr.mxu0 0.0
        %1409 = vmatpush2.msra.mxu0 0.0
        %1410 = vmatprep.mubr.f32.mxu0 0.0
        %1411 = vmatmul.mubr.f32.gmra.mxu0 %v1344
        %v1412 = vpop.f32.mrf.mxu0
        %v1413 = vadd.f32 0.0, %v1412
        %v1414 = vpop.f32.mrf.mxu0
        %1415 = vdwg.mxu0
        %v1416 = vrot.slane %v1303, 7
        %v1417 = vsel %vm1324, %v1416, %v1302
        %v1418 = vrot.slane %v1304, 6
        %v1419 = vsel %vm1327, %v1418, %v1417
        %v1420 = vrot.slane %v1305, 5
        %v1421 = vsel %vm1330, %v1420, %v1419
        %v1422 = vrot.slane %v1306, 4
        %v1423 = vsel %vm1333, %v1422, %v1421
        %v1424 = vrot.slane %v1307, 3
        %v1425 = vsel %vm1336, %v1424, %v1423
        %v1426 = vrot.slane %v1308, 2
        %v1427 = vsel %vm1339, %v1426, %v1425
        %v1428 = vrot.slane %v1309, 1
        %v1429 = vsel %vm1342, %v1428, %v1427
        %v1430 = vsel %vm374, %v1429, 0
        %1432 = vmatprep.subr.mxu0 0.0
        %1433 = vmatpush1.msra.mxu0 0.0
        %1434 = vmatprep.subr.mxu0 0.0
        %1435 = vmatpush1.msra.mxu0 0.0
        %1436 = vmatprep.subr.mxu0 0.0
        %1437 = vmatpush1.msra.mxu0 0.0
        %1438 = vmatprep.subr.mxu0 0.0
        %1439 = vmatpush1.msra.mxu0 0.0
        %1440 = vmatprep.subr.mxu0 0.0
        %1441 = vmatpush1.msra.mxu0 0.0
        %1442 = vmatprep.subr.mxu0 0.0
        %1443 = vmatpush1.msra.mxu0 0.0
        %1444 = vmatprep.subr.mxu0 0.0
        %1445 = vmatpush1.msra.mxu0 0.0
        %1446 = vmatprep.subr.mxu0 0.0
        %1447 = vmatpush1.msra.mxu0 0.0
        %1448 = vmatprep.subr.mxu0 0.0
        %1449 = vmatpush1.msra.mxu0 0.0
        %1450 = vmatprep.subr.mxu0 0.0
        %1451 = vmatpush1.msra.mxu0 0.0
        %1452 = vmatprep.subr.mxu0 0.0
        %1453 = vmatpush1.msra.mxu0 0.0
        %1454 = vmatprep.subr.mxu0 0.0
        %1455 = vmatpush1.msra.mxu0 0.0
        %1456 = vmatprep.subr.mxu0 0.0
        %1457 = vmatpush1.msra.mxu0 0.0
        %1458 = vmatprep.subr.mxu0 0.0
        %1459 = vmatpush1.msra.mxu0 0.0
        %1460 = vmatprep.subr.mxu0 0.0
        %1461 = vmatpush1.msra.mxu0 %v1311
        %1462 = vmatprep.subr.mxu0 0.0
        %1463 = vmatpush1.msra.mxu0 %v1310
        %1464 = vmatprep.subr.mxu0 0.0
        %1465 = vmatpush2.msra.mxu0 0.0
        %1466 = vmatprep.subr.mxu0 0.0
        %1467 = vmatpush2.msra.mxu0 0.0
        %1468 = vmatprep.subr.mxu0 0.0
        %1469 = vmatpush2.msra.mxu0 0.0
        %1470 = vmatprep.subr.mxu0 0.0
        %1471 = vmatpush2.msra.mxu0 0.0
        %1472 = vmatprep.subr.mxu0 0.0
        %1473 = vmatpush2.msra.mxu0 0.0
        %1474 = vmatprep.subr.mxu0 0.0
        %1475 = vmatpush2.msra.mxu0 0.0
        %1476 = vmatprep.subr.mxu0 0.0
        %1477 = vmatpush2.msra.mxu0 0.0
        %1478 = vmatprep.subr.mxu0 0.0
        %1479 = vmatpush2.msra.mxu0 0.0
        %1480 = vmatprep.subr.mxu0 0.0
        %1481 = vmatpush2.msra.mxu0 0.0
        %1482 = vmatprep.subr.mxu0 0.0
        %1483 = vmatpush2.msra.mxu0 0.0
        %1484 = vmatprep.subr.mxu0 0.0
        %1485 = vmatpush2.msra.mxu0 0.0
        %1486 = vmatprep.subr.mxu0 0.0
        %1487 = vmatpush2.msra.mxu0 0.0
        %1488 = vmatprep.subr.mxu0 0.0
        %1489 = vmatpush2.msra.mxu0 0.0
        %1490 = vmatprep.subr.mxu0 0.0
        %1491 = vmatpush2.msra.mxu0 0.0
        %1492 = vmatprep.subr.mxu0 0.0
        %1493 = vmatpush2.msra.mxu0 0.0
        %1494 = vmatprep.subr.mxu0 0.0
        %1495 = vmatpush2.msra.mxu0 0.0
        %1496 = vmatprep.mubr.f32.mxu0 0.0
        %1497 = vmatmul.mubr.f32.gmra.mxu0 %v1430
        %v1498 = vpop.f32.mrf.mxu0
        %v1499 = vadd.f32 %v1413, %v1498
        %v1500 = vpop.f32.mrf.mxu0
        %1501 = vdwg.mxu0
        %s1502 = scalar_lea.vmem %s5, 32
        %v1503 = vld [vmem:[%s1502] sm:$0xff]
        %v1504 = vld [vmem:[%s1502 + $0x8] sm:$0xff]
        %v1505 = vrot.slane %v1302, 2
        %v1506 = vrot.slane %v1303, 1
        %v1507 = vsel %vm1324, %v1506, %v1505
        %v1508 = vsel %vm1327, %v1304, %v1507
        %v1509 = vrot.slane %v1305, 7
        %v1510 = vsel %vm1330, %v1509, %v1508
        %v1511 = vrot.slane %v1306, 6
        %v1512 = vsel %vm1333, %v1511, %v1510
        %v1513 = vrot.slane %v1307, 5
        %v1514 = vsel %vm1336, %v1513, %v1512
        %v1515 = vrot.slane %v1308, 4
        %v1516 = vsel %vm1339, %v1515, %v1514
        %v1517 = vrot.slane %v1309, 3
        %v1518 = vsel %vm1342, %v1517, %v1516
        %v1519 = vsel %vm374, %v1518, 0
        %1521 = vmatprep.subr.mxu0 0.0
        %1522 = vmatpush1.msra.mxu0 0.0
        %1523 = vmatprep.subr.mxu0 0.0
        %1524 = vmatpush1.msra.mxu0 0.0
        %1525 = vmatprep.subr.mxu0 0.0
        %1526 = vmatpush1.msra.mxu0 0.0
        %1527 = vmatprep.subr.mxu0 0.0
        %1528 = vmatpush1.msra.mxu0 0.0
        %1529 = vmatprep.subr.mxu0 0.0
        %1530 = vmatpush1.msra.mxu0 0.0
        %1531 = vmatprep.subr.mxu0 0.0
        %1532 = vmatpush1.msra.mxu0 0.0
        %1533 = vmatprep.subr.mxu0 0.0
        %1534 = vmatpush1.msra.mxu0 0.0
        %1535 = vmatprep.subr.mxu0 0.0
        %1536 = vmatpush1.msra.mxu0 0.0
        %1537 = vmatprep.subr.mxu0 0.0
        %1538 = vmatpush1.msra.mxu0 0.0
        %1539 = vmatprep.subr.mxu0 0.0
        %1540 = vmatpush1.msra.mxu0 0.0
        %1541 = vmatprep.subr.mxu0 0.0
        %1542 = vmatpush1.msra.mxu0 0.0
        %1543 = vmatprep.subr.mxu0 0.0
        %1544 = vmatpush1.msra.mxu0 0.0
        %1545 = vmatprep.subr.mxu0 0.0
        %1546 = vmatpush1.msra.mxu0 0.0
        %1547 = vmatprep.subr.mxu0 0.0
        %1548 = vmatpush1.msra.mxu0 0.0
        %1549 = vmatprep.subr.mxu0 0.0
        %1550 = vmatpush1.msra.mxu0 %v1504
        %1551 = vmatprep.subr.mxu0 0.0
        %1552 = vmatpush1.msra.mxu0 %v1503
        %1553 = vmatprep.subr.mxu0 0.0
        %1554 = vmatpush2.msra.mxu0 0.0
        %1555 = vmatprep.subr.mxu0 0.0
        %1556 = vmatpush2.msra.mxu0 0.0
        %1557 = vmatprep.subr.mxu0 0.0
        %1558 = vmatpush2.msra.mxu0 0.0
        %1559 = vmatprep.subr.mxu0 0.0
        %1560 = vmatpush2.msra.mxu0 0.0
        %1561 = vmatprep.subr.mxu0 0.0
        %1562 = vmatpush2.msra.mxu0 0.0
        %1563 = vmatprep.subr.mxu0 0.0
        %1564 = vmatpush2.msra.mxu0 0.0
        %1565 = vmatprep.subr.mxu0 0.0
        %1566 = vmatpush2.msra.mxu0 0.0
        %1567 = vmatprep.subr.mxu0 0.0
        %1568 = vmatpush2.msra.mxu0 0.0
        %1569 = vmatprep.subr.mxu0 0.0
        %1570 = vmatpush2.msra.mxu0 0.0
        %1571 = vmatprep.subr.mxu0 0.0
        %1572 = vmatpush2.msra.mxu0 0.0
        %1573 = vmatprep.subr.mxu0 0.0
        %1574 = vmatpush2.msra.mxu0 0.0
        %1575 = vmatprep.subr.mxu0 0.0
        %1576 = vmatpush2.msra.mxu0 0.0
        %1577 = vmatprep.subr.mxu0 0.0
        %1578 = vmatpush2.msra.mxu0 0.0
        %1579 = vmatprep.subr.mxu0 0.0
        %1580 = vmatpush2.msra.mxu0 0.0
        %1581 = vmatprep.subr.mxu0 0.0
        %1582 = vmatpush2.msra.mxu0 0.0
        %1583 = vmatprep.subr.mxu0 0.0
        %1584 = vmatpush2.msra.mxu0 0.0
        %1585 = vmatprep.mubr.f32.mxu0 0.0
        %1586 = vmatmul.mubr.f32.gmra.mxu0 %v1519
        %v1587 = vpop.f32.mrf.mxu0
        %v1588 = vadd.f32 0.0, %v1587
        %v1589 = vpop.f32.mrf.mxu0
        %1590 = vdwg.mxu0
        %v1591 = vadd.f32 %v1499, %v1588
        %s1592 = scalar_lea.vmem %s5, 48
        %v1593 = vld [vmem:[%s1592] sm:$0xff]
        %v1594 = vld [vmem:[%s1592 + $0x8] sm:$0xff]
        %v1595 = vrot.slane %v1302, 3
        %v1596 = vrot.slane %v1303, 2
        %v1597 = vsel %vm1324, %v1596, %v1595
        %v1598 = vrot.slane %v1304, 1
        %v1599 = vsel %vm1327, %v1598, %v1597
        %v1600 = vsel %vm1330, %v1305, %v1599
        %v1601 = vrot.slane %v1306, 7
        %v1602 = vsel %vm1333, %v1601, %v1600
        %v1603 = vrot.slane %v1307, 6
        %v1604 = vsel %vm1336, %v1603, %v1602
        %v1605 = vrot.slane %v1308, 5
        %v1606 = vsel %vm1339, %v1605, %v1604
        %v1607 = vrot.slane %v1309, 4
        %v1608 = vsel %vm1342, %v1607, %v1606
        %v1609 = vsel %vm374, %v1608, 0
        %1611 = vmatprep.subr.mxu0 0.0
        %1612 = vmatpush1.msra.mxu0 0.0
        %1613 = vmatprep.subr.mxu0 0.0
        %1614 = vmatpush1.msra.mxu0 0.0
        %1615 = vmatprep.subr.mxu0 0.0
        %1616 = vmatpush1.msra.mxu0 0.0
        %1617 = vmatprep.subr.mxu0 0.0
        %1618 = vmatpush1.msra.mxu0 0.0
        %1619 = vmatprep.subr.mxu0 0.0
        %1620 = vmatpush1.msra.mxu0 0.0
        %1621 = vmatprep.subr.mxu0 0.0
        %1622 = vmatpush1.msra.mxu0 0.0
        %1623 = vmatprep.subr.mxu0 0.0
        %1624 = vmatpush1.msra.mxu0 0.0
        %1625 = vmatprep.subr.mxu0 0.0
        %1626 = vmatpush1.msra.mxu0 0.0
        %1627 = vmatprep.subr.mxu0 0.0
        %1628 = vmatpush1.msra.mxu0 0.0
        %1629 = vmatprep.subr.mxu0 0.0
        %1630 = vmatpush1.msra.mxu0 0.0
        %1631 = vmatprep.subr.mxu0 0.0
        %1632 = vmatpush1.msra.mxu0 0.0
        %1633 = vmatprep.subr.mxu0 0.0
        %1634 = vmatpush1.msra.mxu0 0.0
        %1635 = vmatprep.subr.mxu0 0.0
        %1636 = vmatpush1.msra.mxu0 0.0
        %1637 = vmatprep.subr.mxu0 0.0
        %1638 = vmatpush1.msra.mxu0 0.0
        %1639 = vmatprep.subr.mxu0 0.0
        %1640 = vmatpush1.msra.mxu0 %v1594
        %1641 = vmatprep.subr.mxu0 0.0
        %1642 = vmatpush1.msra.mxu0 %v1593
        %1643 = vmatprep.subr.mxu0 0.0
        %1644 = vmatpush2.msra.mxu0 0.0
        %1645 = vmatprep.subr.mxu0 0.0
        %1646 = vmatpush2.msra.mxu0 0.0
        %1647 = vmatprep.subr.mxu0 0.0
        %1648 = vmatpush2.msra.mxu0 0.0
        %1649 = vmatprep.subr.mxu0 0.0
        %1650 = vmatpush2.msra.mxu0 0.0
        %1651 = vmatprep.subr.mxu0 0.0
        %1652 = vmatpush2.msra.mxu0 0.0
        %1653 = vmatprep.subr.mxu0 0.0
        %1654 = vmatpush2.msra.mxu0 0.0
        %1655 = vmatprep.subr.mxu0 0.0
        %1656 = vmatpush2.msra.mxu0 0.0
        %1657 = vmatprep.subr.mxu0 0.0
        %1658 = vmatpush2.msra.mxu0 0.0
        %1659 = vmatprep.subr.mxu0 0.0
        %1660 = vmatpush2.msra.mxu0 0.0
        %1661 = vmatprep.subr.mxu0 0.0
        %1662 = vmatpush2.msra.mxu0 0.0
        %1663 = vmatprep.subr.mxu0 0.0
        %1664 = vmatpush2.msra.mxu0 0.0
        %1665 = vmatprep.subr.mxu0 0.0
        %1666 = vmatpush2.msra.mxu0 0.0
        %1667 = vmatprep.subr.mxu0 0.0
        %1668 = vmatpush2.msra.mxu0 0.0
        %1669 = vmatprep.subr.mxu0 0.0
        %1670 = vmatpush2.msra.mxu0 0.0
        %1671 = vmatprep.subr.mxu0 0.0
        %1672 = vmatpush2.msra.mxu0 0.0
        %1673 = vmatprep.subr.mxu0 0.0
        %1674 = vmatpush2.msra.mxu0 0.0
        %1675 = vmatprep.mubr.f32.mxu0 0.0
        %1676 = vmatmul.mubr.f32.gmra.mxu0 %v1609
        %v1677 = vpop.f32.mrf.mxu0
        %v1678 = vadd.f32 0.0, %v1677
        %v1679 = vpop.f32.mrf.mxu0
        %1680 = vdwg.mxu0
        %v1681 = vadd.f32 %v1591, %v1678
        %s1682 = scalar_lea.vmem %s5, 64
        %v1683 = vld [vmem:[%s1682] sm:$0xff]
        %v1684 = vld [vmem:[%s1682 + $0x8] sm:$0xff]
        %v1685 = vrot.slane %v1302, 4
        %v1686 = vrot.slane %v1303, 3
        %v1687 = vsel %vm1324, %v1686, %v1685
        %v1688 = vrot.slane %v1304, 2
        %v1689 = vsel %vm1327, %v1688, %v1687
        %v1690 = vrot.slane %v1305, 1
        %v1691 = vsel %vm1330, %v1690, %v1689
        %v1692 = vsel %vm1333, %v1306, %v1691
        %v1693 = vrot.slane %v1307, 7
        %v1694 = vsel %vm1336, %v1693, %v1692
        %v1695 = vrot.slane %v1308, 6
        %v1696 = vsel %vm1339, %v1695, %v1694
        %v1697 = vrot.slane %v1309, 5
        %v1698 = vsel %vm1342, %v1697, %v1696
        %v1699 = vsel %vm374, %v1698, 0
        %1701 = vmatprep.subr.mxu0 0.0
        %1702 = vmatpush1.msra.mxu0 0.0
        %1703 = vmatprep.subr.mxu0 0.0
        %1704 = vmatpush1.msra.mxu0 0.0
        %1705 = vmatprep.subr.mxu0 0.0
        %1706 = vmatpush1.msra.mxu0 0.0
        %1707 = vmatprep.subr.mxu0 0.0
        %1708 = vmatpush1.msra.mxu0 0.0
        %1709 = vmatprep.subr.mxu0 0.0
        %1710 = vmatpush1.msra.mxu0 0.0
        %1711 = vmatprep.subr.mxu0 0.0
        %1712 = vmatpush1.msra.mxu0 0.0
        %1713 = vmatprep.subr.mxu0 0.0
        %1714 = vmatpush1.msra.mxu0 0.0
        %1715 = vmatprep.subr.mxu0 0.0
        %1716 = vmatpush1.msra.mxu0 0.0
        %1717 = vmatprep.subr.mxu0 0.0
        %1718 = vmatpush1.msra.mxu0 0.0
        %1719 = vmatprep.subr.mxu0 0.0
        %1720 = vmatpush1.msra.mxu0 0.0
        %1721 = vmatprep.subr.mxu0 0.0
        %1722 = vmatpush1.msra.mxu0 0.0
        %1723 = vmatprep.subr.mxu0 0.0
        %1724 = vmatpush1.msra.mxu0 0.0
        %1725 = vmatprep.subr.mxu0 0.0
        %1726 = vmatpush1.msra.mxu0 0.0
        %1727 = vmatprep.subr.mxu0 0.0
        %1728 = vmatpush1.msra.mxu0 0.0
        %1729 = vmatprep.subr.mxu0 0.0
        %1730 = vmatpush1.msra.mxu0 %v1684
        %1731 = vmatprep.subr.mxu0 0.0
        %1732 = vmatpush1.msra.mxu0 %v1683
        %1733 = vmatprep.subr.mxu0 0.0
        %1734 = vmatpush2.msra.mxu0 0.0
        %1735 = vmatprep.subr.mxu0 0.0
        %1736 = vmatpush2.msra.mxu0 0.0
        %1737 = vmatprep.subr.mxu0 0.0
        %1738 = vmatpush2.msra.mxu0 0.0
        %1739 = vmatprep.subr.mxu0 0.0
        %1740 = vmatpush2.msra.mxu0 0.0
        %1741 = vmatprep.subr.mxu0 0.0
        %1742 = vmatpush2.msra.mxu0 0.0
        %1743 = vmatprep.subr.mxu0 0.0
        %1744 = vmatpush2.msra.mxu0 0.0
        %1745 = vmatprep.subr.mxu0 0.0
        %1746 = vmatpush2.msra.mxu0 0.0
        %1747 = vmatprep.subr.mxu0 0.0
        %1748 = vmatpush2.msra.mxu0 0.0
        %1749 = vmatprep.subr.mxu0 0.0
        %1750 = vmatpush2.msra.mxu0 0.0
        %1751 = vmatprep.subr.mxu0 0.0
        %1752 = vmatpush2.msra.mxu0 0.0
        %1753 = vmatprep.subr.mxu0 0.0
        %1754 = vmatpush2.msra.mxu0 0.0
        %1755 = vmatprep.subr.mxu0 0.0
        %1756 = vmatpush2.msra.mxu0 0.0
        %1757 = vmatprep.subr.mxu0 0.0
        %1758 = vmatpush2.msra.mxu0 0.0
        %1759 = vmatprep.subr.mxu0 0.0
        %1760 = vmatpush2.msra.mxu0 0.0
        %1761 = vmatprep.subr.mxu0 0.0
        %1762 = vmatpush2.msra.mxu0 0.0
        %1763 = vmatprep.subr.mxu0 0.0
        %1764 = vmatpush2.msra.mxu0 0.0
        %1765 = vmatprep.mubr.f32.mxu0 0.0
        %1766 = vmatmul.mubr.f32.gmra.mxu0 %v1699
        %v1767 = vpop.f32.mrf.mxu0
        %v1768 = vadd.f32 0.0, %v1767
        %v1769 = vpop.f32.mrf.mxu0
        %1770 = vdwg.mxu0
        %v1771 = vadd.f32 %v1681, %v1768
        %s1772 = scalar_lea.vmem %s5, 80
        %v1773 = vld [vmem:[%s1772] sm:$0xff]
        %v1774 = vld [vmem:[%s1772 + $0x8] sm:$0xff]
        %v1775 = vrot.slane %v1302, 5
        %v1776 = vrot.slane %v1303, 4
        %v1777 = vsel %vm1324, %v1776, %v1775
        %v1778 = vrot.slane %v1304, 3
        %v1779 = vsel %vm1327, %v1778, %v1777
        %v1780 = vrot.slane %v1305, 2
        %v1781 = vsel %vm1330, %v1780, %v1779
        %v1782 = vrot.slane %v1306, 1
        %v1783 = vsel %vm1333, %v1782, %v1781
        %v1784 = vsel %vm1336, %v1307, %v1783
        %v1785 = vrot.slane %v1308, 7
        %v1786 = vsel %vm1339, %v1785, %v1784
        %v1787 = vrot.slane %v1309, 6
        %v1788 = vsel %vm1342, %v1787, %v1786
        %v1789 = vsel %vm374, %v1788, 0
        %1791 = vmatprep.subr.mxu0 0.0
        %1792 = vmatpush1.msra.mxu0 0.0
        %1793 = vmatprep.subr.mxu0 0.0
        %1794 = vmatpush1.msra.mxu0 0.0
        %1795 = vmatprep.subr.mxu0 0.0
        %1796 = vmatpush1.msra.mxu0 0.0
        %1797 = vmatprep.subr.mxu0 0.0
        %1798 = vmatpush1.msra.mxu0 0.0
        %1799 = vmatprep.subr.mxu0 0.0
        %1800 = vmatpush1.msra.mxu0 0.0
        %1801 = vmatprep.subr.mxu0 0.0
        %1802 = vmatpush1.msra.mxu0 0.0
        %1803 = vmatprep.subr.mxu0 0.0
        %1804 = vmatpush1.msra.mxu0 0.0
        %1805 = vmatprep.subr.mxu0 0.0
        %1806 = vmatpush1.msra.mxu0 0.0
        %1807 = vmatprep.subr.mxu0 0.0
        %1808 = vmatpush1.msra.mxu0 0.0
        %1809 = vmatprep.subr.mxu0 0.0
        %1810 = vmatpush1.msra.mxu0 0.0
        %1811 = vmatprep.subr.mxu0 0.0
        %1812 = vmatpush1.msra.mxu0 0.0
        %1813 = vmatprep.subr.mxu0 0.0
        %1814 = vmatpush1.msra.mxu0 0.0
        %1815 = vmatprep.subr.mxu0 0.0
        %1816 = vmatpush1.msra.mxu0 0.0
        %1817 = vmatprep.subr.mxu0 0.0
        %1818 = vmatpush1.msra.mxu0 0.0
        %1819 = vmatprep.subr.mxu0 0.0
        %1820 = vmatpush1.msra.mxu0 %v1774
        %1821 = vmatprep.subr.mxu0 0.0
        %1822 = vmatpush1.msra.mxu0 %v1773
        %1823 = vmatprep.subr.mxu0 0.0
        %1824 = vmatpush2.msra.mxu0 0.0
        %1825 = vmatprep.subr.mxu0 0.0
        %1826 = vmatpush2.msra.mxu0 0.0
        %1827 = vmatprep.subr.mxu0 0.0
        %1828 = vmatpush2.msra.mxu0 0.0
        %1829 = vmatprep.subr.mxu0 0.0
        %1830 = vmatpush2.msra.mxu0 0.0
        %1831 = vmatprep.subr.mxu0 0.0
        %1832 = vmatpush2.msra.mxu0 0.0
        %1833 = vmatprep.subr.mxu0 0.0
        %1834 = vmatpush2.msra.mxu0 0.0
        %1835 = vmatprep.subr.mxu0 0.0
        %1836 = vmatpush2.msra.mxu0 0.0
        %1837 = vmatprep.subr.mxu0 0.0
        %1838 = vmatpush2.msra.mxu0 0.0
        %1839 = vmatprep.subr.mxu0 0.0
        %1840 = vmatpush2.msra.mxu0 0.0
        %1841 = vmatprep.subr.mxu0 0.0
        %1842 = vmatpush2.msra.mxu0 0.0
        %1843 = vmatprep.subr.mxu0 0.0
        %1844 = vmatpush2.msra.mxu0 0.0
        %1845 = vmatprep.subr.mxu0 0.0
        %1846 = vmatpush2.msra.mxu0 0.0
        %1847 = vmatprep.subr.mxu0 0.0
        %1848 = vmatpush2.msra.mxu0 0.0
        %1849 = vmatprep.subr.mxu0 0.0
        %1850 = vmatpush2.msra.mxu0 0.0
        %1851 = vmatprep.subr.mxu0 0.0
        %1852 = vmatpush2.msra.mxu0 0.0
        %1853 = vmatprep.subr.mxu0 0.0
        %1854 = vmatpush2.msra.mxu0 0.0
        %1855 = vmatprep.mubr.f32.mxu0 0.0
        %1856 = vmatmul.mubr.f32.gmra.mxu0 %v1789
        %v1857 = vpop.f32.mrf.mxu0
        %v1858 = vadd.f32 0.0, %v1857
        %v1859 = vpop.f32.mrf.mxu0
        %1860 = vdwg.mxu0
        %v1861 = vadd.f32 %v1771, %v1858
        %s1862 = scalar_lea.vmem %s5, 96
        %v1863 = vld [vmem:[%s1862] sm:$0xff]
        %v1864 = vld [vmem:[%s1862 + $0x8] sm:$0xff]
        %v1865 = vrot.slane %v1302, 6
        %v1866 = vrot.slane %v1303, 5
        %v1867 = vsel %vm1324, %v1866, %v1865
        %v1868 = vrot.slane %v1304, 4
        %v1869 = vsel %vm1327, %v1868, %v1867
        %v1870 = vrot.slane %v1305, 3
        %v1871 = vsel %vm1330, %v1870, %v1869
        %v1872 = vrot.slane %v1306, 2
        %v1873 = vsel %vm1333, %v1872, %v1871
        %v1874 = vrot.slane %v1307, 1
        %v1875 = vsel %vm1336, %v1874, %v1873
        %v1876 = vsel %vm1339, %v1308, %v1875
        %v1877 = vrot.slane %v1309, 7
        %v1878 = vsel %vm1342, %v1877, %v1876
        %v1879 = vsel %vm374, %v1878, 0
        %1881 = vmatprep.subr.mxu0 0.0
        %1882 = vmatpush1.msra.mxu0 0.0
        %1883 = vmatprep.subr.mxu0 0.0
        %1884 = vmatpush1.msra.mxu0 0.0
        %1885 = vmatprep.subr.mxu0 0.0
        %1886 = vmatpush1.msra.mxu0 0.0
        %1887 = vmatprep.subr.mxu0 0.0
        %1888 = vmatpush1.msra.mxu0 0.0
        %1889 = vmatprep.subr.mxu0 0.0
        %1890 = vmatpush1.msra.mxu0 0.0
        %1891 = vmatprep.subr.mxu0 0.0
        %1892 = vmatpush1.msra.mxu0 0.0
        %1893 = vmatprep.subr.mxu0 0.0
        %1894 = vmatpush1.msra.mxu0 0.0
        %1895 = vmatprep.subr.mxu0 0.0
        %1896 = vmatpush1.msra.mxu0 0.0
        %1897 = vmatprep.subr.mxu0 0.0
        %1898 = vmatpush1.msra.mxu0 0.0
        %1899 = vmatprep.subr.mxu0 0.0
        %1900 = vmatpush1.msra.mxu0 0.0
        %1901 = vmatprep.subr.mxu0 0.0
        %1902 = vmatpush1.msra.mxu0 0.0
        %1903 = vmatprep.subr.mxu0 0.0
        %1904 = vmatpush1.msra.mxu0 0.0
        %1905 = vmatprep.subr.mxu0 0.0
        %1906 = vmatpush1.msra.mxu0 0.0
        %1907 = vmatprep.subr.mxu0 0.0
        %1908 = vmatpush1.msra.mxu0 0.0
        %1909 = vmatprep.subr.mxu0 0.0
        %1910 = vmatpush1.msra.mxu0 %v1864
        %1911 = vmatprep.subr.mxu0 0.0
        %1912 = vmatpush1.msra.mxu0 %v1863
        %1913 = vmatprep.subr.mxu0 0.0
        %1914 = vmatpush2.msra.mxu0 0.0
        %1915 = vmatprep.subr.mxu0 0.0
        %1916 = vmatpush2.msra.mxu0 0.0
        %1917 = vmatprep.subr.mxu0 0.0
        %1918 = vmatpush2.msra.mxu0 0.0
        %1919 = vmatprep.subr.mxu0 0.0
        %1920 = vmatpush2.msra.mxu0 0.0
        %1921 = vmatprep.subr.mxu0 0.0
        %1922 = vmatpush2.msra.mxu0 0.0
        %1923 = vmatprep.subr.mxu0 0.0
        %1924 = vmatpush2.msra.mxu0 0.0
        %1925 = vmatprep.subr.mxu0 0.0
        %1926 = vmatpush2.msra.mxu0 0.0
        %1927 = vmatprep.subr.mxu0 0.0
        %1928 = vmatpush2.msra.mxu0 0.0
        %1929 = vmatprep.subr.mxu0 0.0
        %1930 = vmatpush2.msra.mxu0 0.0
        %1931 = vmatprep.subr.mxu0 0.0
        %1932 = vmatpush2.msra.mxu0 0.0
        %1933 = vmatprep.subr.mxu0 0.0
        %1934 = vmatpush2.msra.mxu0 0.0
        %1935 = vmatprep.subr.mxu0 0.0
        %1936 = vmatpush2.msra.mxu0 0.0
        %1937 = vmatprep.subr.mxu0 0.0
        %1938 = vmatpush2.msra.mxu0 0.0
        %1939 = vmatprep.subr.mxu0 0.0
        %1940 = vmatpush2.msra.mxu0 0.0
        %1941 = vmatprep.subr.mxu0 0.0
        %1942 = vmatpush2.msra.mxu0 0.0
        %1943 = vmatprep.subr.mxu0 0.0
        %1944 = vmatpush2.msra.mxu0 0.0
        %1945 = vmatprep.mubr.f32.mxu0 0.0
        %1946 = vmatmul.mubr.f32.gmra.mxu0 %v1879
        %v1947 = vpop.f32.mrf.mxu0
        %v1948 = vadd.f32 0.0, %v1947
        %v1949 = vpop.f32.mrf.mxu0
        %1950 = vdwg.mxu0
        %v1951 = vadd.f32 %v1861, %v1948
        %s1952 = scalar_lea.vmem %s5, 112
        %v1953 = vld [vmem:[%s1952] sm:$0xff]
        %v1954 = vld [vmem:[%s1952 + $0x8] sm:$0xff]
        %v1955 = vrot.slane %v1302, 7
        %v1956 = vrot.slane %v1303, 6
        %v1957 = vsel %vm1324, %v1956, %v1955
        %v1958 = vrot.slane %v1304, 5
        %v1959 = vsel %vm1327, %v1958, %v1957
        %v1960 = vrot.slane %v1305, 4
        %v1961 = vsel %vm1330, %v1960, %v1959
        %v1962 = vrot.slane %v1306, 3
        %v1963 = vsel %vm1333, %v1962, %v1961
        %v1964 = vrot.slane %v1307, 2
        %v1965 = vsel %vm1336, %v1964, %v1963
        %v1966 = vrot.slane %v1308, 1
        %v1967 = vsel %vm1339, %v1966, %v1965
        %v1968 = vsel %vm1342, %v1309, %v1967
        %v1969 = vsel %vm374, %v1968, 0
        %1971 = vmatprep.subr.mxu0 0.0
        %1972 = vmatpush1.msra.mxu0 0.0
        %1973 = vmatprep.subr.mxu0 0.0
        %1974 = vmatpush1.msra.mxu0 0.0
        %1975 = vmatprep.subr.mxu0 0.0
        %1976 = vmatpush1.msra.mxu0 0.0
        %1977 = vmatprep.subr.mxu0 0.0
        %1978 = vmatpush1.msra.mxu0 0.0
        %1979 = vmatprep.subr.mxu0 0.0
        %1980 = vmatpush1.msra.mxu0 0.0
        %1981 = vmatprep.subr.mxu0 0.0
        %1982 = vmatpush1.msra.mxu0 0.0
        %1983 = vmatprep.subr.mxu0 0.0
        %1984 = vmatpush1.msra.mxu0 0.0
        %1985 = vmatprep.subr.mxu0 0.0
        %1986 = vmatpush1.msra.mxu0 0.0
        %1987 = vmatprep.subr.mxu0 0.0
        %1988 = vmatpush1.msra.mxu0 0.0
        %1989 = vmatprep.subr.mxu0 0.0
        %1990 = vmatpush1.msra.mxu0 0.0
        %1991 = vmatprep.subr.mxu0 0.0
        %1992 = vmatpush1.msra.mxu0 0.0
        %1993 = vmatprep.subr.mxu0 0.0
        %1994 = vmatpush1.msra.mxu0 0.0
        %1995 = vmatprep.subr.mxu0 0.0
        %1996 = vmatpush1.msra.mxu0 0.0
        %1997 = vmatprep.subr.mxu0 0.0
        %1998 = vmatpush1.msra.mxu0 0.0
        %1999 = vmatprep.subr.mxu0 0.0
        %2000 = vmatpush1.msra.mxu0 %v1954
        %2001 = vmatprep.subr.mxu0 0.0
        %2002 = vmatpush1.msra.mxu0 %v1953
        %2003 = vmatprep.subr.mxu0 0.0
        %2004 = vmatpush2.msra.mxu0 0.0
        %2005 = vmatprep.subr.mxu0 0.0
        %2006 = vmatpush2.msra.mxu0 0.0
        %2007 = vmatprep.subr.mxu0 0.0
        %2008 = vmatpush2.msra.mxu0 0.0
        %2009 = vmatprep.subr.mxu0 0.0
        %2010 = vmatpush2.msra.mxu0 0.0
        %2011 = vmatprep.subr.mxu0 0.0
        %2012 = vmatpush2.msra.mxu0 0.0
        %2013 = vmatprep.subr.mxu0 0.0
        %2014 = vmatpush2.msra.mxu0 0.0
        %2015 = vmatprep.subr.mxu0 0.0
        %2016 = vmatpush2.msra.mxu0 0.0
        %2017 = vmatprep.subr.mxu0 0.0
        %2018 = vmatpush2.msra.mxu0 0.0
        %2019 = vmatprep.subr.mxu0 0.0
        %2020 = vmatpush2.msra.mxu0 0.0
        %2021 = vmatprep.subr.mxu0 0.0
        %2022 = vmatpush2.msra.mxu0 0.0
        %2023 = vmatprep.subr.mxu0 0.0
        %2024 = vmatpush2.msra.mxu0 0.0
        %2025 = vmatprep.subr.mxu0 0.0
        %2026 = vmatpush2.msra.mxu0 0.0
        %2027 = vmatprep.subr.mxu0 0.0
        %2028 = vmatpush2.msra.mxu0 0.0
        %2029 = vmatprep.subr.mxu0 0.0
        %2030 = vmatpush2.msra.mxu0 0.0
        %2031 = vmatprep.subr.mxu0 0.0
        %2032 = vmatpush2.msra.mxu0 0.0
        %2033 = vmatprep.subr.mxu0 0.0
        %2034 = vmatpush2.msra.mxu0 0.0
        %2035 = vmatprep.mubr.f32.mxu0 0.0
        %2036 = vmatmul.mubr.f32.gmra.mxu0 %v1969
        %v2037 = vpop.f32.mrf.mxu0
        %v2038 = vadd.f32 0.0, %v2037
        %v2039 = vpop.f32.mrf.mxu0
        %2040 = vdwg.mxu0
        %v2041 = vadd.f32 %v1951, %v2038
        %v2042 = vld [vmem:[%s6] sm:$0x1]
        %v2044 = vlaneseq
        %v2045 = vshrl.u32 %v2044, 7
        %v2046 = vsub.s32 0, %v2045
        %v2047 = vrot.slane %v2042, %v2046
        %v2049 = vadd.f32 %v2041, %v2047
        %2050 = vst [vmem:[%s272] sm:$0xff] %v2049
        %s2051 = sand.u32 %s181, 1
        %s2052 = scalar_lea.sflag [#allocation3], %s2051
        %s2053 = sand.u32 %s181, 1
        %s2054 = smul.addr %s2053, 8
        %s2055 = scalar_lea.vmem [#allocation2], %s2054
        // Predicated region
        $region49: #{tpu_custom_call.1} parent=47 // pred_check
          %p2056 = pneg %p191
        $region50: #{tpu_custom_call.1} parent=47 // pred_check_branch
          %2058 = sbr.rel (%p2056) target = $region52
        $region51: #{tpu_custom_call.1} parent=47 // pred_region
          %s2060 = ssub.s32 128, 128
          %2061 = vsyncadd %s2052, %s2060
          %s2062 = smul.addr %s21, 128
          %s2063 = scalar_lea.hbm %s7, %s2062
          %s2065 = sshll.u32 %s2055, 4
          %s2066 = int_to_ptr.vmem [resolvable:$true] %s2065
          %2068 = dma.vmem_to_hbm [thread:$0]  %s2066, 128, %s2063, %s2052
        $region52: #{tpu_custom_call.1} parent=47 // pred_fallthru
          _
      $region48: #{tpu_custom_call.1} parent=5 // pred_fallthru
        _
      %p2069 = scmp.le.s32.totalorder 2, %s16
      // Predicated region
      $region53: #{tpu_custom_call.1} parent=5 // pred_check
        %p2070 = pneg %p2069
      $region54: #{tpu_custom_call.1} parent=5 // pred_check_branch
        %2072 = sbr.rel (%p2070) target = $region56
      $region55: #{tpu_custom_call.1} parent=5 // pred_region
        %s2073 = ssub.s32 %s16, 2
        // Predicated region
        $region57: #{tpu_custom_call.1} parent=55 // pred_check
          %p2074 = pneg %p197
        $region58: #{tpu_custom_call.1} parent=55 // pred_check_branch
          %2076 = sbr.rel (%p2074) target = $region60
        $region59: #{tpu_custom_call.1} parent=55 // pred_region
          %s2077 = sand.u32 %s182, 1
          %s2078 = scalar_lea.sflag [#allocation3], %s2077
          %s2079 = sand.u32 %s182, 1
          %s2080 = smul.addr %s2079, 8
          %s2081 = scalar_lea.vmem [#allocation2], %s2080
          %2082 = dma.done %s2078, 128
        $region60: #{tpu_custom_call.1} parent=55 // pred_fallthru
          _
      $region56: #{tpu_custom_call.1} parent=5 // pred_fallthru
        _
    $region6: #{tpu_custom_call.1} parent=1 // loop_footer
      %s20 = sadd.s32 1, %s16
    $region7: #{tpu_custom_call.1} parent=1 // loop_footer_branch
      %15 = sbr.rel target = $region3
    $region8: #{tpu_custom_call.1} parent=1 // loop_exit
      _
    %2083 = vsyncpa [#allocation3], 1
    %s2084 = scalar_lea.sflag [#allocation3], 1
    %2085 = vsyncpa %s2084, 1

</llo_original>
